<compile_context>
chip_gen: v7x
topology: tpu7x:2x2x1
jax: 0.10.0
libtpu: 0.0.40
codegen_flags: <defaults>
</compile_context>

<pallas_src>
import functools

import numpy as np

import jax
import jax.numpy as jnp
from jax.experimental import pallas as pl
from jax.experimental.pallas import tpu as pltpu


_HALO = 3  # max conv half-width (the 7x7 attention conv)


# -----------------------------------------------------------------------------
# Fused forward kernel: one batch element per grid step.
#   x_ref   : (1, H, 2*W*C)  lane-fused [sr | ref] activation, NHWC-flattened
#   wf_ref  : (2, 3, 2WC, 2WC) block-diag banded weights for the 2 fused 3x3s
#   w7_ref  : (7, 2WC, WC)     banded weights for the 7x7 conv (Cin concat folded)
#   wa_ref  : (3, WC, WC)      banded weights for the final 3x3 conv
#   bf_ref  : (2, 2WC)         per-pixel-tiled biases for the fused 3x3s
#   ba_ref  : (2, WC)          per-pixel-tiled biases for the attention convs
#   o_ref   : (1, H, WC)
#   xpad_ref: (H + 6, 2WC)     persistent zero-haloed VMEM scratch
# -----------------------------------------------------------------------------
def _mask_attention_kernel(x_ref, wf_ref, w7_ref, wa_ref, bf_ref, ba_ref,
                           o_ref, xpad_ref, *, H, W, C):
    WC = W * C
    WC2 = 2 * WC
    f32 = jnp.float32
    bf16 = jnp.bfloat16

    # Zero only the halo rows ('same' padding in H); interior rows are rewritten
    # before every conv.  Done every step so it is correct under "parallel"
    # megacore sharding (a core might never execute step 0).
    zeros_halo = jnp.zeros((_HALO, WC2), f32)
    xpad_ref[0:_HALO, :] = zeros_halo
    xpad_ref[_HALO + H:_HALO + H + _HALO, :] = zeros_halo

    def band_conv(x2d, bands, bias_row, act):
        # x2d: (H, n_in) f32.  bands: KH matrices (n_in, n_out) bf16.
        #   out[h] = act(bias + sum_kh x_hpad[h + kh] @ bands[kh])
        kh_n = len(bands)
        p = kh_n // 2
        n_in = x2d.shape[-1]
        n_out = bias_row.shape[-1]
        xpad_ref[_HALO:_HALO + H, :n_in] = x2d                 # interior rows
        # One f32->bf16 cast per conv; per-tap row windows are in-register slices.
        xp = xpad_ref[_HALO - p:_HALO + H + p, :n_in].astype(bf16)
        # Accumulator starts from the broadcast bias (no zeros pass, hoisted).
        acc = jnp.broadcast_to(bias_row, (H, n_out)).astype(f32)
        for kh in range(kh_n):                                 # static unroll
            acc = acc + jnp.dot(xp[kh:kh + H, :], bands[kh],
                                preferred_element_type=f32)
        if act == "relu":
            return jnp.maximum(acc, 0.0)
        return jax.nn.sigmoid(acc)

    x = x_ref[0].astype(f32)                                   # (H, 2WC), no reshape

    # sr & ref feature branches fused lane-wise: two block-diagonal 3x3 convs on
    # the 128-wide activation instead of four 64-wide ones.
    feat = band_conv(x, [wf_ref[0, k] for k in range(3)], bf_ref[0:1, :], "relu")
    feat = band_conv(feat, [wf_ref[1, k] for k in range(3)], bf_ref[1:2, :], "relu")

    # Attention: Conv7x7 over cat([sr_feat, ref_feat], channel) + ReLU.  The
    # channel concat *is* the fused lane layout, so it is one (2WC -> WC) band
    # per tap: 7 dots, no concatenate.
    attn = band_conv(feat, [w7_ref[k] for k in range(7)], ba_ref[0:1, :], "relu")
    # Conv3x3 + Sigmoid.
    attn = band_conv(attn, [wa_ref[k] for k in range(3)], ba_ref[1:2, :], "sigmoid")

    sr_feat = feat[:, :WC]
    ref_feat = feat[:, WC:]
    # sim_lamuda == 1 (int): PyTorch eval default path, attention used as-is.
    #   attn*ref + (1-attn)*sr == sr + attn*(ref - sr)
    o_ref[0] = (sr_feat + attn * (ref_feat - sr_feat)).astype(o_ref.dtype)


# -----------------------------------------------------------------------------
# Host-side weight preparation: fold (KH, KW, Cin, Cout) HWIO conv weights into
# KH banded ("Toeplitz") matrices of shape (W*Cin, W*Cout) so that
#     out2d[h] += xpad2d[h + kh] @ band[kh]
# 'same' zero-padding in W is folded into the band.  The sr/ref branches are
# then lane-fused by block-diagonal stacking; the 7x7's Cin concat by row
# stacking of its two channel halves.
# -----------------------------------------------------------------------------
def _toeplitz_bands(w_hwio, width):
    w_np = np.asarray(w_hwio, dtype=np.float32)
    KH, KW, Cin, Cout = w_np.shape
    p = KW // 2
    band = np.zeros((KH, width * Cin, width * Cout), dtype=np.float32)
    for kh in range(KH):
        for w in range(width):
            for kw in range(KW):
                wi = w + kw - p
                if 0 <= wi < width:
                    band[kh, wi * Cin:(wi + 1) * Cin,
                         w * Cout:(w + 1) * Cout] = w_np[kh, kw]
    return band


def _block_diag_bands(band_a, band_b):
    KH, a_in, a_out = band_a.shape
    _, b_in, b_out = band_b.shape
    out = np.zeros((KH, a_in + b_in, a_out + b_out), dtype=np.float32)
    out[:, :a_in, :a_out] = band_a
    out[:, a_in:, a_out:] = band_b
    return out


def prepare_params(params, width, weight_dtype=jnp.bfloat16):
    """Convert HWIO params into the fused banded / pre-tiled layout."""
    tz = lambda name: _toeplitz_bands(params[name], width)

    wf = np.stack([
        _block_diag_bands(tz("sr_w1"), tz("ref_w1")),
        _block_diag_bands(tz("sr_w2"), tz("ref_w2")),
    ])                                                       # (2, 3, 2WC, 2WC)

    at_w1 = np.asarray(params["at_w1"], dtype=np.float32)    # (7, 7, 2C, C)
    C = at_w1.shape[-1]
    w7 = np.concatenate([
        _toeplitz_bands(at_w1[:, :, :C, :], width),          # sr_feat half of Cin
        _toeplitz_bands(at_w1[:, :, C:, :], width),          # ref_feat half of Cin
    ], axis=1)                                               # (7, 2WC, WC)

    wa = _toeplitz_bands(params["at_w2"], width)             # (3, WC, WC)

    tile = lambda name: np.tile(np.asarray(params[name], np.float32), width)
    bf = np.stack([np.concatenate([tile("sr_b1"), tile("ref_b1")]),
                   np.concatenate([tile("sr_b2"), tile("ref_b2")])])   # (2, 2WC)
    ba = np.stack([tile("at_b1"), tile("at_b2")])                      # (2, WC)

    return (jnp.asarray(wf, weight_dtype), jnp.asarray(w7, weight_dtype),
            jnp.asarray(wa, weight_dtype),
            jnp.asarray(bf, jnp.float32), jnp.asarray(ba, jnp.float32))


# -----------------------------------------------------------------------------
# Full MaskAttention forward.  Inputs/outputs are NCHW (PyTorch interface).
# One fused pallas_call; grid over batch ("parallel" -> shards across v7x TCs).
# -----------------------------------------------------------------------------
def mask_attention_forward(sr_nchw, ref_nchw, prepared):
    wf, w7, wa, bf, ba = prepared
    N, C, H, W = sr_nchw.shape
    WC = W * C

    # NCHW -> NHWC -> (N, H, W*C); lane-fuse sr|ref along the last dim so the
    # kernel activation is (H, 2*W*C) = 128 lanes (one cheap XLA copy per input).
    sr2d = jnp.transpose(sr_nchw, (0, 2, 3, 1)).reshape(N, H, WC)
    ref2d = jnp.transpose(ref_nchw, (0, 2, 3, 1)).reshape(N, H, WC)
    x = jnp.concatenate([sr2d, ref2d], axis=-1).astype(jnp.float32)

    kernel = functools.partial(_mask_attention_kernel, H=H, W=W, C=C)
    out = pl.pallas_call(
        kernel,
        out_shape=jax.ShapeDtypeStruct((N, H, WC), jnp.float32),
        grid=(N,),
        in_specs=[
            pl.BlockSpec((1, H, 2 * WC), lambda n: (n, 0, 0)),         # fused act
            # Constant index maps -> each weight/bias block is DMA'd only once.
            pl.BlockSpec((2, 3, 2 * WC, 2 * WC), lambda n: (0, 0, 0, 0)),
            pl.BlockSpec((7, 2 * WC, WC), lambda n: (0, 0, 0)),
            pl.BlockSpec((3, WC, WC), lambda n: (0, 0, 0)),
            pl.BlockSpec((2, 2 * WC), lambda n: (0, 0)),
            pl.BlockSpec((2, WC), lambda n: (0, 0)),
        ],
        out_specs=pl.BlockSpec((1, H, WC), lambda n: (n, 0, 0)),
        scratch_shapes=[pltpu.VMEM((H + 2 * _HALO, 2 * WC), jnp.float32)],
        compiler_params=pltpu.CompilerParams(
            dimension_semantics=("parallel",),
            vmem_limit_bytes=32 * 1024 * 1024),
    )(x, wf, w7, wa, bf, ba)

    # (N, H, W*C) -> NHWC -> NCHW
    return jnp.transpose(out.reshape(N, H, W, C), (0, 3, 1, 2)).astype(sr_nchw.dtype)


# -----------------------------------------------------------------------------
# Deterministic PyTorch-Conv2d-like init (weights stored in HWIO).
# -----------------------------------------------------------------------------
def init_params(key, channels):
    def conv_init(key, kh, kw, cin, cout):
        kw_key, kb_key = jax.random.split(key)
        bound = 1.0 / np.sqrt(cin * kh * kw)
        w = jax.random.uniform(kw_key, (kh, kw, cin, cout), jnp.float32,
                               -bound, bound)
        b = jax.random.uniform(kb_key, (cout,), jnp.float32, -bound, bound)
        return w, b

    keys = jax.random.split(key, 6)
    p = {}
    p["sr_w1"], p["sr_b1"] = conv_init(keys[0], 3, 3, channels, channels)
    p["sr_w2"], p["sr_b2"] = conv_init(keys[1], 3, 3, channels, channels)
    p["ref_w1"], p["ref_b1"] = conv_init(keys[2], 3, 3, channels, channels)
    p["ref_w2"], p["ref_b2"] = conv_init(keys[3], 3, 3, channels, channels)
    p["at_w1"], p["at_b1"] = conv_init(keys[4], 7, 7, 2 * channels, channels)
    p["at_w2"], p["at_b2"] = conv_init(keys[5], 3, 3, channels, channels)
    return p


# -----------------------------------------------------------------------------
# Pure-JAX (XLA conv) references for the correctness check.
#   quantize=False : full-f32 module semantics (Precision.HIGHEST).
#   quantize=True  : mirrors the kernel's numerics exactly (bf16 weights and
#                    bf16 conv inputs, f32 accumulation, f32 bias/activations).
# -----------------------------------------------------------------------------
def _conv_ref(x, w, b, act, quantize):
    f32 = jnp.float32
    w = jnp.asarray(w, f32)
    if quantize:
        x = x.astype(jnp.bfloat16).astype(f32)
        w = w.astype(jnp.bfloat16).astype(f32)
    y = jax.lax.conv_general_dilated(
        x, w, window_strides=(1, 1), padding="SAME",
        dimension_numbers=("NCHW", "HWIO", "NCHW"),
        precision=jax.lax.Precision.HIGHEST)
    y = y + jnp.asarray(b, f32).reshape(1, -1, 1, 1)
    if act == "relu":
        return jax.nn.relu(y)
    return jax.nn.sigmoid(y)


def reference_forward(sr, ref, params, *, quantize_bf16=False):
    conv = functools.partial(_conv_ref, quantize=quantize_bf16)
    sf = conv(sr, params["sr_w1"], params["sr_b1"], "relu")
    sf = conv(sf, params["sr_w2"], params["sr_b2"], "relu")
    rf = conv(ref, params["ref_w1"], params["ref_b1"], "relu")
    rf = conv(rf, params["ref_w2"], params["ref_b2"], "relu")
    fused = jnp.concatenate([sf, rf], axis=1)
    a = conv(fused, params["at_w1"], params["at_b1"], "relu")
    a = conv(a, params["at_w2"], params["at_b2"], "sigmoid")
    return a * rf + (1.0 - a) * sf


if __name__ == "__main__":
    key = jax.random.PRNGKey(0)
    k_sr, k_ref, k_params = jax.random.split(key, 3)

    N, C, H, W = 2, 4, 16, 16
    sr = jax.random.normal(k_sr, (N, C, H, W), jnp.float32)
    ref = jax.random.normal(k_ref, (N, C, H, W), jnp.float32)
    params = init_params(k_params, C)
    prepared = prepare_params(params, W)          # host-side, once per shape

    out = jax.jit(mask_attention_forward)(sr, ref, prepared)
    jax.block_until_ready(out)
    assert out.shape == (N, C, H, W)

    # Tight check vs a reference with matching numerics (bf16 operands, f32 acc)
    # -> verifies the fused banded-conv structure itself.
    exp_q = reference_forward(sr, ref, params, quantize_bf16=True)
    assert bool(jnp.allclose(out, exp_q, atol=2e-3, rtol=2e-3)), "quantized-ref mismatch"

    # Looser check vs the full-f32 module semantics (gap = bf16 weight storage).
    exp_f32 = reference_forward(sr, ref, params, quantize_bf16=False)
    assert bool(jnp.allclose(out, exp_f32, atol=3e-2, rtol=3e-2)), "f32-ref mismatch"

    print("KERNEL_OK")
</pallas_src>

<mosaic_0001>
module attributes {stable_mosaic.version = 11 : i64} {
  func.func @_mask_attention_kernel(%arg0: i32, %arg1: memref<1x16x128xf32, #tpu.memory_space<vmem>>, %arg2: memref<2x3x128x128xbf16, #tpu.memory_space<vmem>>, %arg3: memref<7x128x64xbf16, #tpu.memory_space<vmem>>, %arg4: memref<3x64x64xbf16, #tpu.memory_space<vmem>>, %arg5: memref<2x128xf32, #tpu.memory_space<vmem>>, %arg6: memref<2x64xf32, #tpu.memory_space<vmem>>, %arg7: memref<1x16x64xf32, #tpu.memory_space<vmem>>, %arg8: memref<22x128xf32, #tpu.memory_space<vmem>>) attributes {dimension_semantics = [#tpu.dimension_semantics<parallel>], iteration_bounds = array<i64: 2>, scalar_prefetch = 0 : i64, scratch_operands = 1 : i64, tpu.core_type = #tpu.core_type<tc>, window_params = [{transform_indices = @transform_0, window_bounds = array<i64: 1, 16, 128>}, {pipeline_mode = #tpu.pipeline_mode<synchronous>, transform_indices = @transform_1, window_bounds = array<i64: 2, 3, 128, 128>}, {pipeline_mode = #tpu.pipeline_mode<synchronous>, transform_indices = @transform_2, window_bounds = array<i64: 7, 128, 64>}, {pipeline_mode = #tpu.pipeline_mode<synchronous>, transform_indices = @transform_3, window_bounds = array<i64: 3, 64, 64>}, {pipeline_mode = #tpu.pipeline_mode<synchronous>, transform_indices = @transform_4, window_bounds = array<i64: 2, 128>}, {pipeline_mode = #tpu.pipeline_mode<synchronous>, transform_indices = @transform_5, window_bounds = array<i64: 2, 64>}, {transform_indices = @transform_6, window_bounds = array<i64: 1, 16, 64>}]} {
    %cst = arith.constant 0.000000e+00 : f32
    %0 = vector.broadcast %cst : f32 to vector<3x128xf32>
    %c0 = arith.constant 0 : index
    %c0_0 = arith.constant 0 : index
    %1 = vector.load %arg8[%c0, %c0_0] : memref<22x128xf32, #tpu.memory_space<vmem>>, vector<3x128xf32>
    tpu.vector_store %arg8[%c0, %c0_0], %0 {strides = array<i32>} : memref<22x128xf32, #tpu.memory_space<vmem>>, vector<3x128xf32>,
    %c19 = arith.constant 19 : index
    %c0_1 = arith.constant 0 : index
    %2 = vector.load %arg8[%c19, %c0_1] : memref<22x128xf32, #tpu.memory_space<vmem>>, vector<3x128xf32>
    tpu.vector_store %arg8[%c19, %c0_1], %0 {strides = array<i32>} : memref<22x128xf32, #tpu.memory_space<vmem>>, vector<3x128xf32>,
    %c0_2 = arith.constant 0 : index
    %c0_3 = arith.constant 0 : index
    %c0_4 = arith.constant 0 : index
    %3 = vector.load %arg1[%c0_2, %c0_3, %c0_4] : memref<1x16x128xf32, #tpu.memory_space<vmem>>, vector<1x16x128xf32>
    %4 = vector.shape_cast %3 : vector<1x16x128xf32> to vector<16x128xf32>
    %c0_5 = arith.constant 0 : index
    %c0_6 = arith.constant 0 : index
    %c0_7 = arith.constant 0 : index
    %c0_8 = arith.constant 0 : index
    %5 = vector.load %arg2[%c0_5, %c0_6, %c0_7, %c0_8] : memref<2x3x128x128xbf16, #tpu.memory_space<vmem>>, vector<1x1x128x128xbf16>
    %6 = vector.shape_cast %5 : vector<1x1x128x128xbf16> to vector<128x128xbf16>
    %c0_9 = arith.constant 0 : index
    %c1 = arith.constant 1 : index
    %c0_10 = arith.constant 0 : index
    %c0_11 = arith.constant 0 : index
    %7 = vector.load %arg2[%c0_9, %c1, %c0_10, %c0_11] : memref<2x3x128x128xbf16, #tpu.memory_space<vmem>>, vector<1x1x128x128xbf16>
    %8 = vector.shape_cast %7 : vector<1x1x128x128xbf16> to vector<128x128xbf16>
    %c0_12 = arith.constant 0 : index
    %c2 = arith.constant 2 : index
    %c0_13 = arith.constant 0 : index
    %c0_14 = arith.constant 0 : index
    %9 = vector.load %arg2[%c0_12, %c2, %c0_13, %c0_14] : memref<2x3x128x128xbf16, #tpu.memory_space<vmem>>, vector<1x1x128x128xbf16>
    %10 = vector.shape_cast %9 : vector<1x1x128x128xbf16> to vector<128x128xbf16>
    %c0_15 = arith.constant 0 : index
    %c0_16 = arith.constant 0 : index
    %11 = vector.load %arg5[%c0_15, %c0_16] : memref<2x128xf32, #tpu.memory_space<vmem>>, vector<1x128xf32>
    %c3 = arith.constant 3 : index
    %c0_17 = arith.constant 0 : index
    %12 = vector.load %arg8[%c3, %c0_17] : memref<22x128xf32, #tpu.memory_space<vmem>>, vector<16x128xf32>
    tpu.vector_store %arg8[%c3, %c0_17], %4 {strides = array<i32>} : memref<22x128xf32, #tpu.memory_space<vmem>>, vector<16x128xf32>,
    %c2_18 = arith.constant 2 : index
    %c0_19 = arith.constant 0 : index
    %13 = vector.load %arg8[%c2_18, %c0_19] : memref<22x128xf32, #tpu.memory_space<vmem>>, vector<18x128xf32>
    %14 = arith.truncf %13 : vector<18x128xf32> to vector<18x128xbf16>
    %15 = vector.shape_cast %11 : vector<1x128xf32> to vector<1x128xf32>
    %16 = vector.broadcast %15 : vector<1x128xf32> to vector<16x128xf32>
    %17 = vector.extract_strided_slice %14 {offsets = [0, 0], sizes = [16, 128], strides = [1, 1]} : vector<18x128xbf16> to vector<16x128xbf16>
    %cst_20 = arith.constant dense<0.000000e+00> : vector<16x128xf32>
    %18 = tpu.matmul %17, %6, %cst_20 {dimension_numbers = #tpu.dot_dimension_numbers<[1], [0], [0], [1], [0, 0, 1, 1], [], []>} : vector<16x128xbf16>, vector<128x128xbf16>, vector<16x128xf32> -> vector<16x128xf32>
    %19 = arith.addf %16, %18 : vector<16x128xf32>
    %20 = vector.extract_strided_slice %14 {offsets = [1, 0], sizes = [16, 128], strides = [1, 1]} : vector<18x128xbf16> to vector<16x128xbf16>
    %cst_21 = arith.constant dense<0.000000e+00> : vector<16x128xf32>
    %21 = tpu.matmul %20, %8, %cst_21 {dimension_numbers = #tpu.dot_dimension_numbers<[1], [0], [0], [1], [0, 0, 1, 1], [], []>} : vector<16x128xbf16>, vector<128x128xbf16>, vector<16x128xf32> -> vector<16x128xf32>
    %22 = arith.addf %19, %21 : vector<16x128xf32>
    %23 = vector.extract_strided_slice %14 {offsets = [2, 0], sizes = [16, 128], strides = [1, 1]} : vector<18x128xbf16> to vector<16x128xbf16>
    %cst_22 = arith.constant dense<0.000000e+00> : vector<16x128xf32>
    %24 = tpu.matmul %23, %10, %cst_22 {dimension_numbers = #tpu.dot_dimension_numbers<[1], [0], [0], [1], [0, 0, 1, 1], [], []>} : vector<16x128xbf16>, vector<128x128xbf16>, vector<16x128xf32> -> vector<16x128xf32>
    %25 = arith.addf %22, %24 : vector<16x128xf32>
    %cst_23 = arith.constant 0.000000e+00 : f32
    %26 = vector.broadcast %cst_23 : f32 to vector<16x128xf32>
    %27 = arith.maximumf %25, %26 : vector<16x128xf32>
    %c1_24 = arith.constant 1 : index
    %c0_25 = arith.constant 0 : index
    %c0_26 = arith.constant 0 : index
    %c0_27 = arith.constant 0 : index
    %28 = vector.load %arg2[%c1_24, %c0_25, %c0_26, %c0_27] : memref<2x3x128x128xbf16, #tpu.memory_space<vmem>>, vector<1x1x128x128xbf16>
    %29 = vector.shape_cast %28 : vector<1x1x128x128xbf16> to vector<128x128xbf16>
    %c1_28 = arith.constant 1 : index
    %c1_29 = arith.constant 1 : index
    %c0_30 = arith.constant 0 : index
    %c0_31 = arith.constant 0 : index
    %30 = vector.load %arg2[%c1_28, %c1_29, %c0_30, %c0_31] : memref<2x3x128x128xbf16, #tpu.memory_space<vmem>>, vector<1x1x128x128xbf16>
    %31 = vector.shape_cast %30 : vector<1x1x128x128xbf16> to vector<128x128xbf16>
    %c1_32 = arith.constant 1 : index
    %c2_33 = arith.constant 2 : index
    %c0_34 = arith.constant 0 : index
    %c0_35 = arith.constant 0 : index
    %32 = vector.load %arg2[%c1_32, %c2_33, %c0_34, %c0_35] : memref<2x3x128x128xbf16, #tpu.memory_space<vmem>>, vector<1x1x128x128xbf16>
    %33 = vector.shape_cast %32 : vector<1x1x128x128xbf16> to vector<128x128xbf16>
    %c1_36 = arith.constant 1 : index
    %c0_37 = arith.constant 0 : index
    %34 = vector.load %arg5[%c1_36, %c0_37] : memref<2x128xf32, #tpu.memory_space<vmem>>, vector<1x128xf32>
    %c3_38 = arith.constant 3 : index
    %c0_39 = arith.constant 0 : index
    %35 = vector.load %arg8[%c3_38, %c0_39] : memref<22x128xf32, #tpu.memory_space<vmem>>, vector<16x128xf32>
    tpu.vector_store %arg8[%c3_38, %c0_39], %27 {strides = array<i32>} : memref<22x128xf32, #tpu.memory_space<vmem>>, vector<16x128xf32>,
    %c2_40 = arith.constant 2 : index
    %c0_41 = arith.constant 0 : index
    %36 = vector.load %arg8[%c2_40, %c0_41] : memref<22x128xf32, #tpu.memory_space<vmem>>, vector<18x128xf32>
    %37 = arith.truncf %36 : vector<18x128xf32> to vector<18x128xbf16>
    %38 = vector.shape_cast %34 : vector<1x128xf32> to vector<1x128xf32>
    %39 = vector.broadcast %38 : vector<1x128xf32> to vector<16x128xf32>
    %40 = vector.extract_strided_slice %37 {offsets = [0, 0], sizes = [16, 128], strides = [1, 1]} : vector<18x128xbf16> to vector<16x128xbf16>
    %cst_42 = arith.constant dense<0.000000e+00> : vector<16x128xf32>
    %41 = tpu.matmul %40, %29, %cst_42 {dimension_numbers = #tpu.dot_dimension_numbers<[1], [0], [0], [1], [0, 0, 1, 1], [], []>} : vector<16x128xbf16>, vector<128x128xbf16>, vector<16x128xf32> -> vector<16x128xf32>
    %42 = arith.addf %39, %41 : vector<16x128xf32>
    %43 = vector.extract_strided_slice %37 {offsets = [1, 0], sizes = [16, 128], strides = [1, 1]} : vector<18x128xbf16> to vector<16x128xbf16>
    %cst_43 = arith.constant dense<0.000000e+00> : vector<16x128xf32>
    %44 = tpu.matmul %43, %31, %cst_43 {dimension_numbers = #tpu.dot_dimension_numbers<[1], [0], [0], [1], [0, 0, 1, 1], [], []>} : vector<16x128xbf16>, vector<128x128xbf16>, vector<16x128xf32> -> vector<16x128xf32>
    %45 = arith.addf %42, %44 : vector<16x128xf32>
    %46 = vector.extract_strided_slice %37 {offsets = [2, 0], sizes = [16, 128], strides = [1, 1]} : vector<18x128xbf16> to vector<16x128xbf16>
    %cst_44 = arith.constant dense<0.000000e+00> : vector<16x128xf32>
    %47 = tpu.matmul %46, %33, %cst_44 {dimension_numbers = #tpu.dot_dimension_numbers<[1], [0], [0], [1], [0, 0, 1, 1], [], []>} : vector<16x128xbf16>, vector<128x128xbf16>, vector<16x128xf32> -> vector<16x128xf32>
    %48 = arith.addf %45, %47 : vector<16x128xf32>
    %cst_45 = arith.constant 0.000000e+00 : f32
    %49 = vector.broadcast %cst_45 : f32 to vector<16x128xf32>
    %50 = arith.maximumf %48, %49 : vector<16x128xf32>
    %c0_46 = arith.constant 0 : index
    %c0_47 = arith.constant 0 : index
    %c0_48 = arith.constant 0 : index
    %51 = vector.load %arg3[%c0_46, %c0_47, %c0_48] : memref<7x128x64xbf16, #tpu.memory_space<vmem>>, vector<1x128x64xbf16>
    %52 = vector.shape_cast %51 : vector<1x128x64xbf16> to vector<128x64xbf16>
    %c1_49 = arith.constant 1 : index
    %c0_50 = arith.constant 0 : index
    %c0_51 = arith.constant 0 : index
    %53 = vector.load %arg3[%c1_49, %c0_50, %c0_51] : memref<7x128x64xbf16, #tpu.memory_space<vmem>>, vector<1x128x64xbf16>
    %54 = vector.shape_cast %53 : vector<1x128x64xbf16> to vector<128x64xbf16>
    %c2_52 = arith.constant 2 : index
    %c0_53 = arith.constant 0 : index
    %c0_54 = arith.constant 0 : index
    %55 = vector.load %arg3[%c2_52, %c0_53, %c0_54] : memref<7x128x64xbf16, #tpu.memory_space<vmem>>, vector<1x128x64xbf16>
    %56 = vector.shape_cast %55 : vector<1x128x64xbf16> to vector<128x64xbf16>
    %c3_55 = arith.constant 3 : index
    %c0_56 = arith.constant 0 : index
    %c0_57 = arith.constant 0 : index
    %57 = vector.load %arg3[%c3_55, %c0_56, %c0_57] : memref<7x128x64xbf16, #tpu.memory_space<vmem>>, vector<1x128x64xbf16>
    %58 = vector.shape_cast %57 : vector<1x128x64xbf16> to vector<128x64xbf16>
    %c4 = arith.constant 4 : index
    %c0_58 = arith.constant 0 : index
    %c0_59 = arith.constant 0 : index
    %59 = vector.load %arg3[%c4, %c0_58, %c0_59] : memref<7x128x64xbf16, #tpu.memory_space<vmem>>, vector<1x128x64xbf16>
    %60 = vector.shape_cast %59 : vector<1x128x64xbf16> to vector<128x64xbf16>
    %c5 = arith.constant 5 : index
    %c0_60 = arith.constant 0 : index
    %c0_61 = arith.constant 0 : index
    %61 = vector.load %arg3[%c5, %c0_60, %c0_61] : memref<7x128x64xbf16, #tpu.memory_space<vmem>>, vector<1x128x64xbf16>
    %62 = vector.shape_cast %61 : vector<1x128x64xbf16> to vector<128x64xbf16>
    %c6 = arith.constant 6 : index
    %c0_62 = arith.constant 0 : index
    %c0_63 = arith.constant 0 : index
    %63 = vector.load %arg3[%c6, %c0_62, %c0_63] : memref<7x128x64xbf16, #tpu.memory_space<vmem>>, vector<1x128x64xbf16>
    %64 = vector.shape_cast %63 : vector<1x128x64xbf16> to vector<128x64xbf16>
    %c0_64 = arith.constant 0 : index
    %c0_65 = arith.constant 0 : index
    %65 = vector.load %arg6[%c0_64, %c0_65] : memref<2x64xf32, #tpu.memory_space<vmem>>, vector<1x64xf32>
    %c3_66 = arith.constant 3 : index
    %c0_67 = arith.constant 0 : index
    %66 = vector.load %arg8[%c3_66, %c0_67] : memref<22x128xf32, #tpu.memory_space<vmem>>, vector<16x128xf32>
    tpu.vector_store %arg8[%c3_66, %c0_67], %50 {strides = array<i32>} : memref<22x128xf32, #tpu.memory_space<vmem>>, vector<16x128xf32>,
    %c0_68 = arith.constant 0 : index
    %c0_69 = arith.constant 0 : index
    %67 = vector.load %arg8[%c0_68, %c0_69] : memref<22x128xf32, #tpu.memory_space<vmem>>, vector<22x128xf32>
    %68 = arith.truncf %67 : vector<22x128xf32> to vector<22x128xbf16>
    %69 = vector.shape_cast %65 : vector<1x64xf32> to vector<1x64xf32>
    %70 = vector.broadcast %69 : vector<1x64xf32> to vector<16x64xf32>
    %71 = vector.extract_strided_slice %68 {offsets = [0, 0], sizes = [16, 128], strides = [1, 1]} : vector<22x128xbf16> to vector<16x128xbf16>
    %cst_70 = arith.constant dense<0.000000e+00> : vector<16x64xf32>
    %72 = tpu.matmul %71, %52, %cst_70 {dimension_numbers = #tpu.dot_dimension_numbers<[1], [0], [0], [1], [0, 0, 1, 1], [], []>} : vector<16x128xbf16>, vector<128x64xbf16>, vector<16x64xf32> -> vector<16x64xf32>
    %73 = arith.addf %70, %72 : vector<16x64xf32>
    %74 = vector.extract_strided_slice %68 {offsets = [1, 0], sizes = [16, 128], strides = [1, 1]} : vector<22x128xbf16> to vector<16x128xbf16>
    %cst_71 = arith.constant dense<0.000000e+00> : vector<16x64xf32>
    %75 = tpu.matmul %74, %54, %cst_71 {dimension_numbers = #tpu.dot_dimension_numbers<[1], [0], [0], [1], [0, 0, 1, 1], [], []>} : vector<16x128xbf16>, vector<128x64xbf16>, vector<16x64xf32> -> vector<16x64xf32>
    %76 = arith.addf %73, %75 : vector<16x64xf32>
    %77 = vector.extract_strided_slice %68 {offsets = [2, 0], sizes = [16, 128], strides = [1, 1]} : vector<22x128xbf16> to vector<16x128xbf16>
    %cst_72 = arith.constant dense<0.000000e+00> : vector<16x64xf32>
    %78 = tpu.matmul %77, %56, %cst_72 {dimension_numbers = #tpu.dot_dimension_numbers<[1], [0], [0], [1], [0, 0, 1, 1], [], []>} : vector<16x128xbf16>, vector<128x64xbf16>, vector<16x64xf32> -> vector<16x64xf32>
    %79 = arith.addf %76, %78 : vector<16x64xf32>
    %80 = vector.extract_strided_slice %68 {offsets = [3, 0], sizes = [16, 128], strides = [1, 1]} : vector<22x128xbf16> to vector<16x128xbf16>
    %cst_73 = arith.constant dense<0.000000e+00> : vector<16x64xf32>
    %81 = tpu.matmul %80, %58, %cst_73 {dimension_numbers = #tpu.dot_dimension_numbers<[1], [0], [0], [1], [0, 0, 1, 1], [], []>} : vector<16x128xbf16>, vector<128x64xbf16>, vector<16x64xf32> -> vector<16x64xf32>
    %82 = arith.addf %79, %81 : vector<16x64xf32>
    %83 = vector.extract_strided_slice %68 {offsets = [4, 0], sizes = [16, 128], strides = [1, 1]} : vector<22x128xbf16> to vector<16x128xbf16>
    %cst_74 = arith.constant dense<0.000000e+00> : vector<16x64xf32>
    %84 = tpu.matmul %83, %60, %cst_74 {dimension_numbers = #tpu.dot_dimension_numbers<[1], [0], [0], [1], [0, 0, 1, 1], [], []>} : vector<16x128xbf16>, vector<128x64xbf16>, vector<16x64xf32> -> vector<16x64xf32>
    %85 = arith.addf %82, %84 : vector<16x64xf32>
    %86 = vector.extract_strided_slice %68 {offsets = [5, 0], sizes = [16, 128], strides = [1, 1]} : vector<22x128xbf16> to vector<16x128xbf16>
    %cst_75 = arith.constant dense<0.000000e+00> : vector<16x64xf32>
    %87 = tpu.matmul %86, %62, %cst_75 {dimension_numbers = #tpu.dot_dimension_numbers<[1], [0], [0], [1], [0, 0, 1, 1], [], []>} : vector<16x128xbf16>, vector<128x64xbf16>, vector<16x64xf32> -> vector<16x64xf32>
    %88 = arith.addf %85, %87 : vector<16x64xf32>
    %89 = vector.extract_strided_slice %68 {offsets = [6, 0], sizes = [16, 128], strides = [1, 1]} : vector<22x128xbf16> to vector<16x128xbf16>
    %cst_76 = arith.constant dense<0.000000e+00> : vector<16x64xf32>
    %90 = tpu.matmul %89, %64, %cst_76 {dimension_numbers = #tpu.dot_dimension_numbers<[1], [0], [0], [1], [0, 0, 1, 1], [], []>} : vector<16x128xbf16>, vector<128x64xbf16>, vector<16x64xf32> -> vector<16x64xf32>
    %91 = arith.addf %88, %90 : vector<16x64xf32>
    %cst_77 = arith.constant 0.000000e+00 : f32
    %92 = vector.broadcast %cst_77 : f32 to vector<16x64xf32>
    %93 = arith.maximumf %91, %92 : vector<16x64xf32>
    %c0_78 = arith.constant 0 : index
    %c0_79 = arith.constant 0 : index
    %c0_80 = arith.constant 0 : index
    %94 = vector.load %arg4[%c0_78, %c0_79, %c0_80] : memref<3x64x64xbf16, #tpu.memory_space<vmem>>, vector<1x64x64xbf16>
    %95 = vector.shape_cast %94 : vector<1x64x64xbf16> to vector<64x64xbf16>
    %c1_81 = arith.constant 1 : index
    %c0_82 = arith.constant 0 : index
    %c0_83 = arith.constant 0 : index
    %96 = vector.load %arg4[%c1_81, %c0_82, %c0_83] : memref<3x64x64xbf16, #tpu.memory_space<vmem>>, vector<1x64x64xbf16>
    %97 = vector.shape_cast %96 : vector<1x64x64xbf16> to vector<64x64xbf16>
    %c2_84 = arith.constant 2 : index
    %c0_85 = arith.constant 0 : index
    %c0_86 = arith.constant 0 : index
    %98 = vector.load %arg4[%c2_84, %c0_85, %c0_86] : memref<3x64x64xbf16, #tpu.memory_space<vmem>>, vector<1x64x64xbf16>
    %99 = vector.shape_cast %98 : vector<1x64x64xbf16> to vector<64x64xbf16>
    %c1_87 = arith.constant 1 : index
    %c0_88 = arith.constant 0 : index
    %100 = vector.load %arg6[%c1_87, %c0_88] : memref<2x64xf32, #tpu.memory_space<vmem>>, vector<1x64xf32>
    %c3_89 = arith.constant 3 : index
    %c0_90 = arith.constant 0 : index
    %101 = vector.load %arg8[%c3_89, %c0_90] : memref<22x128xf32, #tpu.memory_space<vmem>>, vector<16x64xf32>
    tpu.vector_store %arg8[%c3_89, %c0_90], %93 {strides = array<i32>} : memref<22x128xf32, #tpu.memory_space<vmem>>, vector<16x64xf32>,
    %c2_91 = arith.constant 2 : index
    %c0_92 = arith.constant 0 : index
    %102 = vector.load %arg8[%c2_91, %c0_92] : memref<22x128xf32, #tpu.memory_space<vmem>>, vector<18x64xf32>
    %103 = arith.truncf %102 : vector<18x64xf32> to vector<18x64xbf16>
    %104 = vector.shape_cast %100 : vector<1x64xf32> to vector<1x64xf32>
    %105 = vector.broadcast %104 : vector<1x64xf32> to vector<16x64xf32>
    %106 = vector.extract_strided_slice %103 {offsets = [0, 0], sizes = [16, 64], strides = [1, 1]} : vector<18x64xbf16> to vector<16x64xbf16>
    %cst_93 = arith.constant dense<0.000000e+00> : vector<16x64xf32>
    %107 = tpu.matmul %106, %95, %cst_93 {dimension_numbers = #tpu.dot_dimension_numbers<[1], [0], [0], [1], [0, 0, 1, 1], [], []>} : vector<16x64xbf16>, vector<64x64xbf16>, vector<16x64xf32> -> vector<16x64xf32>
    %108 = arith.addf %105, %107 : vector<16x64xf32>
    %109 = vector.extract_strided_slice %103 {offsets = [1, 0], sizes = [16, 64], strides = [1, 1]} : vector<18x64xbf16> to vector<16x64xbf16>
    %cst_94 = arith.constant dense<0.000000e+00> : vector<16x64xf32>
    %110 = tpu.matmul %109, %97, %cst_94 {dimension_numbers = #tpu.dot_dimension_numbers<[1], [0], [0], [1], [0, 0, 1, 1], [], []>} : vector<16x64xbf16>, vector<64x64xbf16>, vector<16x64xf32> -> vector<16x64xf32>
    %111 = arith.addf %108, %110 : vector<16x64xf32>
    %112 = vector.extract_strided_slice %103 {offsets = [2, 0], sizes = [16, 64], strides = [1, 1]} : vector<18x64xbf16> to vector<16x64xbf16>
    %cst_95 = arith.constant dense<0.000000e+00> : vector<16x64xf32>
    %113 = tpu.matmul %112, %99, %cst_95 {dimension_numbers = #tpu.dot_dimension_numbers<[1], [0], [0], [1], [0, 0, 1, 1], [], []>} : vector<16x64xbf16>, vector<64x64xbf16>, vector<16x64xf32> -> vector<16x64xf32>
    %114 = arith.addf %111, %113 : vector<16x64xf32>
    %115 = arith.negf %114 : vector<16x64xf32>
    %116 = math.exp %115 : vector<16x64xf32>
    %cst_96 = arith.constant 1.000000e+00 : f32
    %117 = vector.broadcast %cst_96 : f32 to vector<16x64xf32>
    %118 = arith.addf %117, %116 : vector<16x64xf32>
    %119 = arith.divf %117, %118 : vector<16x64xf32>
    %120 = vector.extract_strided_slice %50 {offsets = [0, 0], sizes = [16, 64], strides = [1, 1]} : vector<16x128xf32> to vector<16x64xf32>
    %121 = vector.extract_strided_slice %50 {offsets = [0, 64], sizes = [16, 64], strides = [1, 1]} : vector<16x128xf32> to vector<16x64xf32>
    %122 = arith.subf %121, %120 : vector<16x64xf32>
    %123 = arith.mulf %119, %122 : vector<16x64xf32>
    %124 = arith.addf %120, %123 : vector<16x64xf32>
    %c0_97 = arith.constant 0 : index
    %c0_98 = arith.constant 0 : index
    %c0_99 = arith.constant 0 : index
    %125 = vector.load %arg7[%c0_97, %c0_98, %c0_99] : memref<1x16x64xf32, #tpu.memory_space<vmem>>, vector<1x16x64xf32>
    %126 = vector.shape_cast %125 : vector<1x16x64xf32> to vector<16x64xf32>
    %127 = vector.shape_cast %124 : vector<16x64xf32> to vector<1x16x64xf32>
    tpu.vector_store %arg7[%c0_97, %c0_98, %c0_99], %127 {strides = array<i32>} : memref<1x16x64xf32, #tpu.memory_space<vmem>>, vector<1x16x64xf32>,
    return
  }
  func.func @transform_0(%arg0: i32) -> (i32, i32, i32) {
    %c0_i32 = arith.constant 0 : i32
    %c0_i32_0 = arith.constant 0 : i32
    %c0_i32_1 = arith.constant 0 : i32
    return %arg0, %c0_i32, %c0_i32_0 : i32, i32, i32
  }
  func.func @transform_1(%arg0: i32) -> (i32, i32, i32, i32) {
    %c0_i32 = arith.constant 0 : i32
    %c0_i32_0 = arith.constant 0 : i32
    %c0_i32_1 = arith.constant 0 : i32
    %c0_i32_2 = arith.constant 0 : i32
    %c0_i32_3 = arith.constant 0 : i32
    return %c0_i32, %c0_i32_0, %c0_i32_1, %c0_i32_2 : i32, i32, i32, i32
  }
  func.func @transform_2(%arg0: i32) -> (i32, i32, i32) {
    %c0_i32 = arith.constant 0 : i32
    %c0_i32_0 = arith.constant 0 : i32
    %c0_i32_1 = arith.constant 0 : i32
    %c0_i32_2 = arith.constant 0 : i32
    return %c0_i32, %c0_i32_0, %c0_i32_1 : i32, i32, i32
  }
  func.func @transform_3(%arg0: i32) -> (i32, i32, i32) {
    %c0_i32 = arith.constant 0 : i32
    %c0_i32_0 = arith.constant 0 : i32
    %c0_i32_1 = arith.constant 0 : i32
    %c0_i32_2 = arith.constant 0 : i32
    return %c0_i32, %c0_i32_0, %c0_i32_1 : i32, i32, i32
  }
  func.func @transform_4(%arg0: i32) -> (i32, i32) {
    %c0_i32 = arith.constant 0 : i32
    %c0_i32_0 = arith.constant 0 : i32
    %c0_i32_1 = arith.constant 0 : i32
    return %c0_i32, %c0_i32_0 : i32, i32
  }
  func.func @transform_5(%arg0: i32) -> (i32, i32) {
    %c0_i32 = arith.constant 0 : i32
    %c0_i32_0 = arith.constant 0 : i32
    %c0_i32_1 = arith.constant 0 : i32
    return %c0_i32, %c0_i32_0 : i32, i32
  }
  func.func @transform_6(%arg0: i32) -> (i32, i32, i32) {
    %c0_i32 = arith.constant 0 : i32
    %c0_i32_0 = arith.constant 0 : i32
    %c0_i32_1 = arith.constant 0 : i32
    return %arg0, %c0_i32, %c0_i32_0 : i32, i32, i32
  }
}

</mosaic_0001>

<llo_original>
// kernel: mask_attention_forward.1
$region0: #{mask_attention_forward.1}
  #allocation0 [shape = 'u32[]', space=smem, size = 0x4, offset = 0x4, fixed_abs, tag = 'smem constant byte address 0x4 - core index']
  #allocation1 [shape = 'u32[144,128]{1,0:T(1,128)}', space=vmem, size = 0x12000, scoped, tag = 'internal scratch']
  #allocation2 [shape = 'f32[22,128]{1,0:T(8,128)}', space=vmem, size = 0x3000, scoped, tag = 'scratch operand']
  %s0 = inlined_call_operand.vmem [shape: f32[2,16,128], index: 0, kind: input, shape index: {}]
  %s1 = inlined_call_operand.vmem [shape: bf16[2,3,128,128], index: 1, kind: input, shape index: {}]
  %s2 = inlined_call_operand.vmem [shape: bf16[7,128,64], index: 2, kind: input, shape index: {}]
  %s3 = inlined_call_operand.vmem [shape: bf16[3,64,64], index: 3, kind: input, shape index: {}]
  %s4 = inlined_call_operand.vmem [shape: f32[2,128], index: 4, kind: input, shape index: {}]
  %s5 = inlined_call_operand.vmem [shape: f32[2,64], index: 5, kind: input, shape index: {}]
  %s6 = inlined_call_operand.vmem [shape: f32[2,16,64], index: 6, kind: output, shape index: {}]
  %s7 = sld [smem:[#allocation0]]
  $region57: #{mask_attention_forward.1} parent=0
    _
  %s9 = ssub.s32 1, %s7
  %s10 = scalar_select 0, %s9, %s7
  loop: start=0, step=1, limit=4
  $region2: #{mask_attention_forward.1} parent=0 // loop_pre_header
    _
  $region3: #{mask_attention_forward.1} parent=0 // loop_header
    %s12 = sphi 0, %s16
    %p13 = scmp.ge.s32.totalorder %s12, 4
    %s22 = sphi 0, %s24
    %s25 = sphi 0, %s22
    %s26 = sphi 0, %s25
    %s42 = sphi 0, %s26
    %s46 = sphi 0, %s46
    %s48 = sphi 0, %s46
    %s49 = sphi 0, %s48
    %s63 = sphi 0, %s49
    %s67 = sphi 0, %s67
    %s69 = sphi 0, %s67
    %s70 = sphi 0, %s69
    %s84 = sphi 0, %s70
    %s88 = sphi 0, %s88
    %s90 = sphi 0, %s88
    %s91 = sphi 0, %s90
    %s105 = sphi 0, %s91
    %s109 = sphi 0, %s109
    %s111 = sphi 0, %s109
    %s112 = sphi 0, %s111
    %s126 = sphi 0, %s112
    %s130 = sphi 0, %s130
    %s132 = sphi 0, %s130
    %s133 = sphi 0, %s132
    %s147 = sphi 0, %s133
    %s153 = sphi 0, %s155
    %s156 = sphi 0, %s153
    %s157 = sphi 0, %s156
    %s173 = sphi 0, %s157
  $region4: #{mask_attention_forward.1} parent=0 // loop_header_branch
    %15 = sbr.rel (%p13) target = $region8
  $region5: #{mask_attention_forward.1} parent=0 // loop_body
    %s17 = ssub.s32 %s12, 1
    %s18 = ssub.s32 %s12, 2
    %s19 = sadd.s32 %s12, 1
    %s20 = ssub.s32 %s12, %s19
    %p21 = scmp.eq.s32.totalorder %s20, 0
    %s23 = sadd.s32 %s22, 1
    %s24 = scalar_select %p21, %s22, %s23
    %p27 = pneg %p21
    %p28 = scmp.eq.s32.totalorder %s12, 1
    %p29 = por %p27, %p28
    %p30 = scmp.ne.s32.totalorder %s22, %s25
    %p31 = scmp.eq.s32.totalorder %s12, 0
    %p32 = por %p30, %p31
    %p33 = scmp.ne.s32.totalorder %s22, %s25
    %p34 = scmp.eq.s32.totalorder %s17, 1
    %p35 = por %p33, %p34
    %p36 = scmp.ne.s32.totalorder %s25, %s26
    %p37 = scmp.eq.s32.totalorder %s17, 0
    %p38 = por %p36, %p37
    %p39 = scmp.ne.s32.totalorder %s25, %s26
    %p40 = scmp.eq.s32.totalorder %s18, 1
    %p41 = por %p39, %p40
    %p43 = scmp.ne.s32.totalorder %s26, %s42
    %p44 = scmp.eq.s32.totalorder %s18, 0
    %p45 = por %p43, %p44
    %s47 = sadd.s32 %s46, 1
    %p50 = scmp.eq.s32.totalorder %s12, 1
    %p51 = scmp.ne.s32.totalorder %s46, %s48
    %p52 = scmp.eq.s32.totalorder %s12, 0
    %p53 = por %p51, %p52
    %p54 = scmp.ne.s32.totalorder %s46, %s48
    %p55 = scmp.eq.s32.totalorder %s17, 1
    %p56 = por %p54, %p55
    %p57 = scmp.ne.s32.totalorder %s48, %s49
    %p58 = scmp.eq.s32.totalorder %s17, 0
    %p59 = por %p57, %p58
    %p60 = scmp.ne.s32.totalorder %s48, %s49
    %p61 = scmp.eq.s32.totalorder %s18, 1
    %p62 = por %p60, %p61
    %p64 = scmp.ne.s32.totalorder %s49, %s63
    %p65 = scmp.eq.s32.totalorder %s18, 0
    %p66 = por %p64, %p65
    %s68 = sadd.s32 %s67, 1
    %p71 = scmp.eq.s32.totalorder %s12, 1
    %p72 = scmp.ne.s32.totalorder %s67, %s69
    %p73 = scmp.eq.s32.totalorder %s12, 0
    %p74 = por %p72, %p73
    %p75 = scmp.ne.s32.totalorder %s67, %s69
    %p76 = scmp.eq.s32.totalorder %s17, 1
    %p77 = por %p75, %p76
    %p78 = scmp.ne.s32.totalorder %s69, %s70
    %p79 = scmp.eq.s32.totalorder %s17, 0
    %p80 = por %p78, %p79
    %p81 = scmp.ne.s32.totalorder %s69, %s70
    %p82 = scmp.eq.s32.totalorder %s18, 1
    %p83 = por %p81, %p82
    %p85 = scmp.ne.s32.totalorder %s70, %s84
    %p86 = scmp.eq.s32.totalorder %s18, 0
    %p87 = por %p85, %p86
    %s89 = sadd.s32 %s88, 1
    %p92 = scmp.eq.s32.totalorder %s12, 1
    %p93 = scmp.ne.s32.totalorder %s88, %s90
    %p94 = scmp.eq.s32.totalorder %s12, 0
    %p95 = por %p93, %p94
    %p96 = scmp.ne.s32.totalorder %s88, %s90
    %p97 = scmp.eq.s32.totalorder %s17, 1
    %p98 = por %p96, %p97
    %p99 = scmp.ne.s32.totalorder %s90, %s91
    %p100 = scmp.eq.s32.totalorder %s17, 0
    %p101 = por %p99, %p100
    %p102 = scmp.ne.s32.totalorder %s90, %s91
    %p103 = scmp.eq.s32.totalorder %s18, 1
    %p104 = por %p102, %p103
    %p106 = scmp.ne.s32.totalorder %s91, %s105
    %p107 = scmp.eq.s32.totalorder %s18, 0
    %p108 = por %p106, %p107
    %s110 = sadd.s32 %s109, 1
    %p113 = scmp.eq.s32.totalorder %s12, 1
    %p114 = scmp.ne.s32.totalorder %s109, %s111
    %p115 = scmp.eq.s32.totalorder %s12, 0
    %p116 = por %p114, %p115
    %p117 = scmp.ne.s32.totalorder %s109, %s111
    %p118 = scmp.eq.s32.totalorder %s17, 1
    %p119 = por %p117, %p118
    %p120 = scmp.ne.s32.totalorder %s111, %s112
    %p121 = scmp.eq.s32.totalorder %s17, 0
    %p122 = por %p120, %p121
    %p123 = scmp.ne.s32.totalorder %s111, %s112
    %p124 = scmp.eq.s32.totalorder %s18, 1
    %p125 = por %p123, %p124
    %p127 = scmp.ne.s32.totalorder %s112, %s126
    %p128 = scmp.eq.s32.totalorder %s18, 0
    %p129 = por %p127, %p128
    %s131 = sadd.s32 %s130, 1
    %p134 = scmp.eq.s32.totalorder %s12, 1
    %p135 = scmp.ne.s32.totalorder %s130, %s132
    %p136 = scmp.eq.s32.totalorder %s12, 0
    %p137 = por %p135, %p136
    %p138 = scmp.ne.s32.totalorder %s130, %s132
    %p139 = scmp.eq.s32.totalorder %s17, 1
    %p140 = por %p138, %p139
    %p141 = scmp.ne.s32.totalorder %s132, %s133
    %p142 = scmp.eq.s32.totalorder %s17, 0
    %p143 = por %p141, %p142
    %p144 = scmp.ne.s32.totalorder %s132, %s133
    %p145 = scmp.eq.s32.totalorder %s18, 1
    %p146 = por %p144, %p145
    %p148 = scmp.ne.s32.totalorder %s133, %s147
    %p149 = scmp.eq.s32.totalorder %s18, 0
    %p150 = por %p148, %p149
    %s151 = ssub.s32 %s12, %s19
    %p152 = scmp.eq.s32.totalorder %s151, 0
    %s154 = sadd.s32 %s153, 1
    %s155 = scalar_select %p152, %s153, %s154
    %p158 = pneg %p152
    %p159 = scmp.eq.s32.totalorder %s12, 1
    %p160 = por %p158, %p159
    %p161 = scmp.ne.s32.totalorder %s153, %s156
    %p162 = scmp.eq.s32.totalorder %s12, 0
    %p163 = por %p161, %p162
    %p164 = scmp.ne.s32.totalorder %s153, %s156
    %p165 = scmp.eq.s32.totalorder %s17, 1
    %p166 = por %p164, %p165
    %p167 = scmp.ne.s32.totalorder %s156, %s157
    %p168 = scmp.eq.s32.totalorder %s17, 0
    %p169 = por %p167, %p168
    %p170 = scmp.ne.s32.totalorder %s156, %s157
    %p171 = scmp.eq.s32.totalorder %s18, 1
    %p172 = por %p170, %p171
    %p174 = scmp.ne.s32.totalorder %s157, %s173
    %p175 = scmp.eq.s32.totalorder %s18, 0
    %p176 = por %p174, %p175
    %p177 = scmp.le.s32.totalorder 1, %s12
    %p178 = scmp.lt.s32.totalorder %s12, 3
    %p179 = pnand %p177, %p178
    %p180 = pneg %p179
    // Predicated region
    $region9: #{mask_attention_forward.1} parent=5 // pred_check
      _
    $region10: #{mask_attention_forward.1} parent=5 // pred_check_branch
      %182 = sbr.rel (%p179) target = $region12
    $region11: #{mask_attention_forward.1} parent=5 // pred_region
      %s183 = ssub.s32 %s12, 1
      // Predicated region
      $region13: #{mask_attention_forward.1} parent=11 // pred_check
        %p184 = pneg %p59
      $region14: #{mask_attention_forward.1} parent=11 // pred_check_branch
        %186 = sbr.rel (%p184) target = $region16
      $region15: #{mask_attention_forward.1} parent=11 // pred_region
        _
      $region16: #{mask_attention_forward.1} parent=11 // pred_fallthru
        _
      // Predicated region
      $region17: #{mask_attention_forward.1} parent=11 // pred_check
        %p187 = pneg %p80
      $region18: #{mask_attention_forward.1} parent=11 // pred_check_branch
        %189 = sbr.rel (%p187) target = $region20
      $region19: #{mask_attention_forward.1} parent=11 // pred_region
        _
      $region20: #{mask_attention_forward.1} parent=11 // pred_fallthru
        _
      // Predicated region
      $region21: #{mask_attention_forward.1} parent=11 // pred_check
        %p190 = pneg %p101
      $region22: #{mask_attention_forward.1} parent=11 // pred_check_branch
        %192 = sbr.rel (%p190) target = $region24
      $region23: #{mask_attention_forward.1} parent=11 // pred_region
        _
      $region24: #{mask_attention_forward.1} parent=11 // pred_fallthru
        _
      // Predicated region
      $region25: #{mask_attention_forward.1} parent=11 // pred_check
        %p193 = pneg %p122
      $region26: #{mask_attention_forward.1} parent=11 // pred_check_branch
        %195 = sbr.rel (%p193) target = $region28
      $region27: #{mask_attention_forward.1} parent=11 // pred_region
        _
      $region28: #{mask_attention_forward.1} parent=11 // pred_fallthru
        _
      // Predicated region
      $region29: #{mask_attention_forward.1} parent=11 // pred_check
        %p196 = pneg %p143
      $region30: #{mask_attention_forward.1} parent=11 // pred_check_branch
        %198 = sbr.rel (%p196) target = $region32
      $region31: #{mask_attention_forward.1} parent=11 // pred_region
        _
      $region32: #{mask_attention_forward.1} parent=11 // pred_fallthru
        _
    $region12: #{mask_attention_forward.1} parent=5 // pred_fallthru
      _
    %p199 = scmp.lt.s32.totalorder %s12, 2
    // Predicated region
    $region33: #{mask_attention_forward.1} parent=5 // pred_check
      %p200 = pneg %p199
    $region34: #{mask_attention_forward.1} parent=5 // pred_check_branch
      %202 = sbr.rel (%p200) target = $region36
    $region35: #{mask_attention_forward.1} parent=5 // pred_region
      // Predicated region
      $region37: #{mask_attention_forward.1} parent=35 // pred_check
        %p203 = pneg %p32
      $region38: #{mask_attention_forward.1} parent=35 // pred_check_branch
        %205 = sbr.rel (%p203) target = $region40
      $region39: #{mask_attention_forward.1} parent=35 // pred_region
        %p206 = scmp.lt.s32.totalorder %s12, 1
        %s207 = scalar_select %p206, %s12, 1
        %s208 = smul.addr %s207, 2
        %s209 = smul.addr %s208, 8
        %s210 = scalar_lea.vmem %s0, %s209
      $region40: #{mask_attention_forward.1} parent=35 // pred_fallthru
        _
    $region36: #{mask_attention_forward.1} parent=5 // pred_fallthru
      _
    %p211 = scmp.le.s32.totalorder 1, %s12
    %p212 = scmp.lt.s32.totalorder %s12, 3
    %p213 = pnand %p211, %p212
    %p214 = pneg %p213
    // Predicated region
    $region41: #{mask_attention_forward.1} parent=5 // pred_check
      _
    $region42: #{mask_attention_forward.1} parent=5 // pred_check_branch
      %216 = sbr.rel (%p213) target = $region44
    $region43: #{mask_attention_forward.1} parent=5 // pred_region
      %s217 = ssub.s32 %s12, 1
      %p218 = scmp.lt.s32.totalorder %s17, 1
      %s219 = scalar_select %p218, %s17, 1
      %s220 = smul.addr %s219, 2
      %s221 = smul.addr %s220, 8
      %s222 = scalar_lea.vmem %s0, %s221
      %p223 = pneg %p38
      %p224 = pneg %p35
      %p225 = pneg %p59
      %p226 = pneg %p56
      %p227 = pneg %p80
      %p228 = pneg %p77
      %p229 = pneg %p101
      %p230 = pneg %p98
      %p231 = pneg %p122
      %p232 = pneg %p119
      %p233 = pneg %p143
      %p234 = pneg %p140
      %p235 = pneg %p169
      %p236 = pneg %p166
      %p237 = scmp.lt.s32.totalorder %s17, 1
      %s238 = scalar_select %p237, %s17, 1
      %s239 = smul.addr %s238, 2
      %s240 = smul.addr %s239, 8
      %s241 = scalar_lea.vmem %s6, %s240
      %p242 = scmp.lt.s32.totalorder %s17, 1
      %s243 = scalar_select %p242, %s17, 1
      %s244 = smul.addr %s243, 2
      %s245 = smul.addr %s244, 8
      %s246 = scalar_lea.vmem %s0, %s245
      %p247 = scmp.lt.s32.totalorder %s17, 1
      %s248 = scalar_select %p247, %s17, 1
      %s249 = smul.addr %s248, 2
      %s250 = smul.addr %s249, 8
      %s251 = scalar_lea.vmem %s6, %s250
      %253 = vst [vmem:[#allocation2] sm:$0x7] 0.0
      %254 = vst [vmem:[#allocation2 + $0x13] sm:$0x7] 0.0
      %v255 = vld [vmem:[%s246] sm:$0xff]
      %v256 = vld [vmem:[%s246 + $0x8] sm:$0xff]
      %v257 = vld [vmem:[%s1] sm:$0xf]
      %v258 = vld [vmem:[%s1 + $0x4] sm:$0xf]
      %v259 = vld [vmem:[%s1 + $0x8] sm:$0xf]
      %v260 = vld [vmem:[%s1 + $0xc] sm:$0xf]
      %v261 = vld [vmem:[%s1 + $0x10] sm:$0xf]
      %v262 = vld [vmem:[%s1 + $0x14] sm:$0xf]
      %v263 = vld [vmem:[%s1 + $0x18] sm:$0xf]
      %v264 = vld [vmem:[%s1 + $0x1c] sm:$0xf]
      %v265 = vld [vmem:[%s1 + $0x20] sm:$0xf]
      %v266 = vld [vmem:[%s1 + $0x24] sm:$0xf]
      %v267 = vld [vmem:[%s1 + $0x28] sm:$0xf]
      %v268 = vld [vmem:[%s1 + $0x2c] sm:$0xf]
      %v269 = vld [vmem:[%s1 + $0x30] sm:$0xf]
      %v270 = vld [vmem:[%s1 + $0x34] sm:$0xf]
      %v271 = vld [vmem:[%s1 + $0x38] sm:$0xf]
      %v272 = vld [vmem:[%s1 + $0x3c] sm:$0xf]
      %s273 = scalar_lea.vmem %s1, 64
      %v274 = vld [vmem:[%s273] sm:$0xf]
      %v275 = vld [vmem:[%s273 + $0x4] sm:$0xf]
      %v276 = vld [vmem:[%s273 + $0x8] sm:$0xf]
      %v277 = vld [vmem:[%s273 + $0xc] sm:$0xf]
      %v278 = vld [vmem:[%s273 + $0x10] sm:$0xf]
      %v279 = vld [vmem:[%s273 + $0x14] sm:$0xf]
      %v280 = vld [vmem:[%s273 + $0x18] sm:$0xf]
      %v281 = vld [vmem:[%s273 + $0x1c] sm:$0xf]
      %v282 = vld [vmem:[%s273 + $0x20] sm:$0xf]
      %v283 = vld [vmem:[%s273 + $0x24] sm:$0xf]
      %v284 = vld [vmem:[%s273 + $0x28] sm:$0xf]
      %v285 = vld [vmem:[%s273 + $0x2c] sm:$0xf]
      %v286 = vld [vmem:[%s273 + $0x30] sm:$0xf]
      %v287 = vld [vmem:[%s273 + $0x34] sm:$0xf]
      %v288 = vld [vmem:[%s273 + $0x38] sm:$0xf]
      %v289 = vld [vmem:[%s273 + $0x3c] sm:$0xf]
      %s290 = scalar_lea.vmem %s1, 128
      %v291 = vld [vmem:[%s290] sm:$0xf]
      %v292 = vld [vmem:[%s290 + $0x4] sm:$0xf]
      %v293 = vld [vmem:[%s290 + $0x8] sm:$0xf]
      %v294 = vld [vmem:[%s290 + $0xc] sm:$0xf]
      %v295 = vld [vmem:[%s290 + $0x10] sm:$0xf]
      %v296 = vld [vmem:[%s290 + $0x14] sm:$0xf]
      %v297 = vld [vmem:[%s290 + $0x18] sm:$0xf]
      %v298 = vld [vmem:[%s290 + $0x1c] sm:$0xf]
      %v299 = vld [vmem:[%s290 + $0x20] sm:$0xf]
      %v300 = vld [vmem:[%s290 + $0x24] sm:$0xf]
      %v301 = vld [vmem:[%s290 + $0x28] sm:$0xf]
      %v302 = vld [vmem:[%s290 + $0x2c] sm:$0xf]
      %v303 = vld [vmem:[%s290 + $0x30] sm:$0xf]
      %v304 = vld [vmem:[%s290 + $0x34] sm:$0xf]
      %v305 = vld [vmem:[%s290 + $0x38] sm:$0xf]
      %v306 = vld [vmem:[%s290 + $0x3c] sm:$0xf]
      %v307 = vld [vmem:[%s4] sm:$0x1]
      %308 = vst [vmem:[#allocation2 + $0x3] sm:$0xff] %v255
      %309 = vst [vmem:[#allocation2 + $0xb] sm:$0xff] %v256
      %v310 = vld [vmem:[#allocation2 + $0x2] sm:$0xff]
      %v311 = vld [vmem:[#allocation2 + $0xa] sm:$0xff]
      %v312 = vld [vmem:[#allocation2 + $0x12] sm:$0x3]
      %v313 = vpack.c.bf16 %v311, %v310
      %v314 = vpack.c.bf16 %v312, %v312
      %v315 = vlaneseq
      %v316 = vshrl.u32 %v315, 7
      %v317 = vsub.s32 0, %v316
      %v318 = vrot.slane %v307, %v317
      %v335 = vunpack.c.l.b16 %v257
      %v336 = vunpack.c.l.b16 %v258
      %v337 = vunpack.c.l.b16 %v259
      %v338 = vunpack.c.l.b16 %v260
      %v339 = vunpack.c.l.b16 %v261
      %v340 = vunpack.c.l.b16 %v262
      %v341 = vunpack.c.l.b16 %v263
      %v342 = vunpack.c.l.b16 %v264
      %v343 = vunpack.c.l.b16 %v265
      %v344 = vunpack.c.l.b16 %v266
      %v345 = vunpack.c.l.b16 %v267
      %v346 = vunpack.c.l.b16 %v268
      %v347 = vunpack.c.l.b16 %v269
      %v348 = vunpack.c.l.b16 %v270
      %v349 = vunpack.c.l.b16 %v271
      %v350 = vunpack.c.l.b16 %v272
      %v351 = vpack.c.b16 %v336, %v335
      %v352 = vpack.c.b16 %v338, %v337
      %v353 = vpack.c.b16 %v340, %v339
      %v354 = vpack.c.b16 %v342, %v341
      %v355 = vpack.c.b16 %v344, %v343
      %v356 = vpack.c.b16 %v346, %v345
      %v357 = vpack.c.b16 %v348, %v347
      %v358 = vpack.c.b16 %v350, %v349
      %367 = vmatprep.subr.bf16.mxu0 0
      %368 = vmatpush1.bf16.msra.mxu0 %v351
      %369 = vmatprep.subr.bf16.mxu0 0
      %370 = vmatpush1.bf16.msra.mxu0 %v352
      %371 = vmatprep.subr.bf16.mxu0 0
      %372 = vmatpush1.bf16.msra.mxu0 %v353
      %373 = vmatprep.subr.bf16.mxu0 0
      %374 = vmatpush1.bf16.msra.mxu0 %v354
      %375 = vmatprep.subr.bf16.mxu0 0
      %376 = vmatpush1.bf16.msra.mxu0 %v355
      %377 = vmatprep.subr.bf16.mxu0 0
      %378 = vmatpush1.bf16.msra.mxu0 %v356
      %379 = vmatprep.subr.bf16.mxu0 0
      %380 = vmatpush1.bf16.msra.mxu0 %v357
      %381 = vmatprep.subr.bf16.mxu0 0
      %382 = vmatpush1.bf16.msra.mxu0 %v358
      %383 = vmatprep.subr.bf16.mxu0 0
      %384 = vmatpush1.bf16.msra.mxu0 0
      %385 = vmatprep.subr.bf16.mxu0 0
      %386 = vmatpush1.bf16.msra.mxu0 0
      %387 = vmatprep.subr.bf16.mxu0 0
      %388 = vmatpush1.bf16.msra.mxu0 0
      %389 = vmatprep.subr.bf16.mxu0 0
      %390 = vmatpush1.bf16.msra.mxu0 0
      %391 = vmatprep.subr.bf16.mxu0 0
      %392 = vmatpush1.bf16.msra.mxu0 0
      %393 = vmatprep.subr.bf16.mxu0 0
      %394 = vmatpush1.bf16.msra.mxu0 0
      %395 = vmatprep.subr.bf16.mxu0 0
      %396 = vmatpush1.bf16.msra.mxu0 0
      %397 = vmatprep.subr.bf16.mxu0 0
      %398 = vmatpush1.bf16.msra.mxu0 0
      %399 = vmatprep.mubr.bf16.mxu0 0
      %400 = vmatmul.mubr.bf16.gmra.mrb[0].mxu0 %v313
      %v401 = vpop.f32.mrb[0].mxu0
      %v402 = vadd.f32 0.0, %v401
      %v403 = vpop.f32.mrb[0].mxu0
      %v404 = vpop.f32.mrb[0].mxu0
      %v405 = vadd.f32 0.0, %v404
      %v406 = vpop.f32.mrb[0].mxu0
      %407 = vdwg.mxu0
      %v408 = vadd.f32 %v318, %v402
      %v409 = vadd.f32 %v318, %v405
      %vm410 = vsmask.f32 7424
      %v412 = vshrl.u32 %v313, 16
      %v414 = vshll.u32 %v313, 16
      %v416 = vrot.slane %v414, 1
      %v417 = vor.u32 %v412, %v416
      %v419 = vshll.u32 %v314, 16
      %v421 = vrot.slane %v419, 1
      %v422 = vsel %vm410, %v417, %v421
      %v440 = vunpack.c.l.b16 %v274
      %v441 = vunpack.c.l.b16 %v275
      %v442 = vunpack.c.l.b16 %v276
      %v443 = vunpack.c.l.b16 %v277
      %v444 = vunpack.c.l.b16 %v278
      %v445 = vunpack.c.l.b16 %v279
      %v446 = vunpack.c.l.b16 %v280
      %v447 = vunpack.c.l.b16 %v281
      %v448 = vunpack.c.l.b16 %v282
      %v449 = vunpack.c.l.b16 %v283
      %v450 = vunpack.c.l.b16 %v284
      %v451 = vunpack.c.l.b16 %v285
      %v452 = vunpack.c.l.b16 %v286
      %v453 = vunpack.c.l.b16 %v287
      %v454 = vunpack.c.l.b16 %v288
      %v455 = vunpack.c.l.b16 %v289
      %v456 = vpack.c.b16 %v441, %v440
      %v457 = vpack.c.b16 %v443, %v442
      %v458 = vpack.c.b16 %v445, %v444
      %v459 = vpack.c.b16 %v447, %v446
      %v460 = vpack.c.b16 %v449, %v448
      %v461 = vpack.c.b16 %v451, %v450
      %v462 = vpack.c.b16 %v453, %v452
      %v463 = vpack.c.b16 %v455, %v454
      %472 = vmatprep.subr.bf16.mxu0 0
      %473 = vmatpush1.bf16.msra.mxu0 %v456
      %474 = vmatprep.subr.bf16.mxu0 0
      %475 = vmatpush1.bf16.msra.mxu0 %v457
      %476 = vmatprep.subr.bf16.mxu0 0
      %477 = vmatpush1.bf16.msra.mxu0 %v458
      %478 = vmatprep.subr.bf16.mxu0 0
      %479 = vmatpush1.bf16.msra.mxu0 %v459
      %480 = vmatprep.subr.bf16.mxu0 0
      %481 = vmatpush1.bf16.msra.mxu0 %v460
      %482 = vmatprep.subr.bf16.mxu0 0
      %483 = vmatpush1.bf16.msra.mxu0 %v461
      %484 = vmatprep.subr.bf16.mxu0 0
      %485 = vmatpush1.bf16.msra.mxu0 %v462
      %486 = vmatprep.subr.bf16.mxu0 0
      %487 = vmatpush1.bf16.msra.mxu0 %v463
      %488 = vmatprep.subr.bf16.mxu0 0
      %489 = vmatpush1.bf16.msra.mxu0 0
      %490 = vmatprep.subr.bf16.mxu0 0
      %491 = vmatpush1.bf16.msra.mxu0 0
      %492 = vmatprep.subr.bf16.mxu0 0
      %493 = vmatpush1.bf16.msra.mxu0 0
      %494 = vmatprep.subr.bf16.mxu0 0
      %495 = vmatpush1.bf16.msra.mxu0 0
      %496 = vmatprep.subr.bf16.mxu0 0
      %497 = vmatpush1.bf16.msra.mxu0 0
      %498 = vmatprep.subr.bf16.mxu0 0
      %499 = vmatpush1.bf16.msra.mxu0 0
      %500 = vmatprep.subr.bf16.mxu0 0
      %501 = vmatpush1.bf16.msra.mxu0 0
      %502 = vmatprep.subr.bf16.mxu0 0
      %503 = vmatpush1.bf16.msra.mxu0 0
      %504 = vmatprep.mubr.bf16.mxu0 0
      %505 = vmatmul.mubr.bf16.gmra.mrb[0].mxu0 %v422
      %v506 = vpop.f32.mrb[0].mxu0
      %v507 = vadd.f32 0.0, %v506
      %v508 = vpop.f32.mrb[0].mxu0
      %v509 = vpop.f32.mrb[0].mxu0
      %v510 = vadd.f32 0.0, %v509
      %v511 = vpop.f32.mrb[0].mxu0
      %512 = vdwg.mxu0
      %v513 = vadd.f32 %v408, %v507
      %v514 = vadd.f32 %v409, %v510
      %vm517 = vcmask 1046528
      %v518 = vrot.slane %v313, 1
      %v519 = vrot.slane %v314, 1
      %v520 = vsel %vm517, %v518, %v519
      %v538 = vunpack.c.l.b16 %v291
      %v539 = vunpack.c.l.b16 %v292
      %v540 = vunpack.c.l.b16 %v293
      %v541 = vunpack.c.l.b16 %v294
      %v542 = vunpack.c.l.b16 %v295
      %v543 = vunpack.c.l.b16 %v296
      %v544 = vunpack.c.l.b16 %v297
      %v545 = vunpack.c.l.b16 %v298
      %v546 = vunpack.c.l.b16 %v299
      %v547 = vunpack.c.l.b16 %v300
      %v548 = vunpack.c.l.b16 %v301
      %v549 = vunpack.c.l.b16 %v302
      %v550 = vunpack.c.l.b16 %v303
      %v551 = vunpack.c.l.b16 %v304
      %v552 = vunpack.c.l.b16 %v305
      %v553 = vunpack.c.l.b16 %v306
      %v554 = vpack.c.b16 %v539, %v538
      %v555 = vpack.c.b16 %v541, %v540
      %v556 = vpack.c.b16 %v543, %v542
      %v557 = vpack.c.b16 %v545, %v544
      %v558 = vpack.c.b16 %v547, %v546
      %v559 = vpack.c.b16 %v549, %v548
      %v560 = vpack.c.b16 %v551, %v550
      %v561 = vpack.c.b16 %v553, %v552
      %570 = vmatprep.subr.bf16.mxu0 0
      %571 = vmatpush1.bf16.msra.mxu0 %v554
      %572 = vmatprep.subr.bf16.mxu0 0
      %573 = vmatpush1.bf16.msra.mxu0 %v555
      %574 = vmatprep.subr.bf16.mxu0 0
      %575 = vmatpush1.bf16.msra.mxu0 %v556
      %576 = vmatprep.subr.bf16.mxu0 0
      %577 = vmatpush1.bf16.msra.mxu0 %v557
      %578 = vmatprep.subr.bf16.mxu0 0
      %579 = vmatpush1.bf16.msra.mxu0 %v558
      %580 = vmatprep.subr.bf16.mxu0 0
      %581 = vmatpush1.bf16.msra.mxu0 %v559
      %582 = vmatprep.subr.bf16.mxu0 0
      %583 = vmatpush1.bf16.msra.mxu0 %v560
      %584 = vmatprep.subr.bf16.mxu0 0
      %585 = vmatpush1.bf16.msra.mxu0 %v561
      %586 = vmatprep.subr.bf16.mxu0 0
      %587 = vmatpush1.bf16.msra.mxu0 0
      %588 = vmatprep.subr.bf16.mxu0 0
      %589 = vmatpush1.bf16.msra.mxu0 0
      %590 = vmatprep.subr.bf16.mxu0 0
      %591 = vmatpush1.bf16.msra.mxu0 0
      %592 = vmatprep.subr.bf16.mxu0 0
      %593 = vmatpush1.bf16.msra.mxu0 0
      %594 = vmatprep.subr.bf16.mxu0 0
      %595 = vmatpush1.bf16.msra.mxu0 0
      %596 = vmatprep.subr.bf16.mxu0 0
      %597 = vmatpush1.bf16.msra.mxu0 0
      %598 = vmatprep.subr.bf16.mxu0 0
      %599 = vmatpush1.bf16.msra.mxu0 0
      %600 = vmatprep.subr.bf16.mxu0 0
      %601 = vmatpush1.bf16.msra.mxu0 0
      %602 = vmatprep.mubr.bf16.mxu0 0
      %603 = vmatmul.mubr.bf16.gmra.mrb[0].mxu0 %v520
      %v604 = vpop.f32.mrb[0].mxu0
      %v605 = vadd.f32 0.0, %v604
      %v606 = vpop.f32.mrb[0].mxu0
      %v607 = vpop.f32.mrb[0].mxu0
      %v608 = vadd.f32 0.0, %v607
      %v609 = vpop.f32.mrb[0].mxu0
      %610 = vdwg.mxu0
      %v611 = vadd.f32 %v513, %v605
      %v612 = vadd.f32 %v514, %v608
      %v613 = vmax.f32 %v611, 0.0
      %v614 = vmax.f32 %v612, 0.0
      %s615 = scalar_lea.vmem %s1, 192
      %v616 = vld [vmem:[%s615] sm:$0xf]
      %v617 = vld [vmem:[%s615 + $0x4] sm:$0xf]
      %v618 = vld [vmem:[%s615 + $0x8] sm:$0xf]
      %v619 = vld [vmem:[%s615 + $0xc] sm:$0xf]
      %v620 = vld [vmem:[%s615 + $0x10] sm:$0xf]
      %v621 = vld [vmem:[%s615 + $0x14] sm:$0xf]
      %v622 = vld [vmem:[%s615 + $0x18] sm:$0xf]
      %v623 = vld [vmem:[%s615 + $0x1c] sm:$0xf]
      %v624 = vld [vmem:[%s615 + $0x20] sm:$0xf]
      %v625 = vld [vmem:[%s615 + $0x24] sm:$0xf]
      %v626 = vld [vmem:[%s615 + $0x28] sm:$0xf]
      %v627 = vld [vmem:[%s615 + $0x2c] sm:$0xf]
      %v628 = vld [vmem:[%s615 + $0x30] sm:$0xf]
      %v629 = vld [vmem:[%s615 + $0x34] sm:$0xf]
      %v630 = vld [vmem:[%s615 + $0x38] sm:$0xf]
      %v631 = vld [vmem:[%s615 + $0x3c] sm:$0xf]
      %s632 = scalar_lea.vmem %s1, 256
      %v633 = vld [vmem:[%s632] sm:$0xf]
      %v634 = vld [vmem:[%s632 + $0x4] sm:$0xf]
      %v635 = vld [vmem:[%s632 + $0x8] sm:$0xf]
      %v636 = vld [vmem:[%s632 + $0xc] sm:$0xf]
      %v637 = vld [vmem:[%s632 + $0x10] sm:$0xf]
      %v638 = vld [vmem:[%s632 + $0x14] sm:$0xf]
      %v639 = vld [vmem:[%s632 + $0x18] sm:$0xf]
      %v640 = vld [vmem:[%s632 + $0x1c] sm:$0xf]
      %v641 = vld [vmem:[%s632 + $0x20] sm:$0xf]
      %v642 = vld [vmem:[%s632 + $0x24] sm:$0xf]
      %v643 = vld [vmem:[%s632 + $0x28] sm:$0xf]
      %v644 = vld [vmem:[%s632 + $0x2c] sm:$0xf]
      %v645 = vld [vmem:[%s632 + $0x30] sm:$0xf]
      %v646 = vld [vmem:[%s632 + $0x34] sm:$0xf]
      %v647 = vld [vmem:[%s632 + $0x38] sm:$0xf]
      %v648 = vld [vmem:[%s632 + $0x3c] sm:$0xf]
      %s649 = scalar_lea.vmem %s1, 320
      %v650 = vld [vmem:[%s649] sm:$0xf]
      %v651 = vld [vmem:[%s649 + $0x4] sm:$0xf]
      %v652 = vld [vmem:[%s649 + $0x8] sm:$0xf]
      %v653 = vld [vmem:[%s649 + $0xc] sm:$0xf]
      %v654 = vld [vmem:[%s649 + $0x10] sm:$0xf]
      %v655 = vld [vmem:[%s649 + $0x14] sm:$0xf]
      %v656 = vld [vmem:[%s649 + $0x18] sm:$0xf]
      %v657 = vld [vmem:[%s649 + $0x1c] sm:$0xf]
      %v658 = vld [vmem:[%s649 + $0x20] sm:$0xf]
      %v659 = vld [vmem:[%s649 + $0x24] sm:$0xf]
      %v660 = vld [vmem:[%s649 + $0x28] sm:$0xf]
      %v661 = vld [vmem:[%s649 + $0x2c] sm:$0xf]
      %v662 = vld [vmem:[%s649 + $0x30] sm:$0xf]
      %v663 = vld [vmem:[%s649 + $0x34] sm:$0xf]
      %v664 = vld [vmem:[%s649 + $0x38] sm:$0xf]
      %v665 = vld [vmem:[%s649 + $0x3c] sm:$0xf]
      %v666 = vld [vmem:[%s4 + $0x1] sm:$0x1]
      %667 = vst [vmem:[#allocation2 + $0x3] sm:$0xff] %v613
      %668 = vst [vmem:[#allocation2 + $0xb] sm:$0xff] %v614
      %v669 = vld [vmem:[#allocation2 + $0x2] sm:$0xff]
      %v670 = vld [vmem:[#allocation2 + $0xa] sm:$0xff]
      %v671 = vld [vmem:[#allocation2 + $0x12] sm:$0x3]
      %v672 = vpack.c.bf16 %v670, %v669
      %v673 = vpack.c.bf16 %v671, %v671
      %v674 = vlaneseq
      %v675 = vshrl.u32 %v674, 7
      %v676 = vsub.s32 0, %v675
      %v677 = vrot.slane %v666, %v676
      %v694 = vunpack.c.l.b16 %v616
      %v695 = vunpack.c.l.b16 %v617
      %v696 = vunpack.c.l.b16 %v618
      %v697 = vunpack.c.l.b16 %v619
      %v698 = vunpack.c.l.b16 %v620
      %v699 = vunpack.c.l.b16 %v621
      %v700 = vunpack.c.l.b16 %v622
      %v701 = vunpack.c.l.b16 %v623
      %v702 = vunpack.c.l.b16 %v624
      %v703 = vunpack.c.l.b16 %v625
      %v704 = vunpack.c.l.b16 %v626
      %v705 = vunpack.c.l.b16 %v627
      %v706 = vunpack.c.l.b16 %v628
      %v707 = vunpack.c.l.b16 %v629
      %v708 = vunpack.c.l.b16 %v630
      %v709 = vunpack.c.l.b16 %v631
      %v710 = vpack.c.b16 %v695, %v694
      %v711 = vpack.c.b16 %v697, %v696
      %v712 = vpack.c.b16 %v699, %v698
      %v713 = vpack.c.b16 %v701, %v700
      %v714 = vpack.c.b16 %v703, %v702
      %v715 = vpack.c.b16 %v705, %v704
      %v716 = vpack.c.b16 %v707, %v706
      %v717 = vpack.c.b16 %v709, %v708
      %726 = vmatprep.subr.bf16.mxu0 0
      %727 = vmatpush1.bf16.msra.mxu0 %v710
      %728 = vmatprep.subr.bf16.mxu0 0
      %729 = vmatpush1.bf16.msra.mxu0 %v711
      %730 = vmatprep.subr.bf16.mxu0 0
      %731 = vmatpush1.bf16.msra.mxu0 %v712
      %732 = vmatprep.subr.bf16.mxu0 0
      %733 = vmatpush1.bf16.msra.mxu0 %v713
      %734 = vmatprep.subr.bf16.mxu0 0
      %735 = vmatpush1.bf16.msra.mxu0 %v714
      %736 = vmatprep.subr.bf16.mxu0 0
      %737 = vmatpush1.bf16.msra.mxu0 %v715
      %738 = vmatprep.subr.bf16.mxu0 0
      %739 = vmatpush1.bf16.msra.mxu0 %v716
      %740 = vmatprep.subr.bf16.mxu0 0
      %741 = vmatpush1.bf16.msra.mxu0 %v717
      %742 = vmatprep.subr.bf16.mxu0 0
      %743 = vmatpush1.bf16.msra.mxu0 0
      %744 = vmatprep.subr.bf16.mxu0 0
      %745 = vmatpush1.bf16.msra.mxu0 0
      %746 = vmatprep.subr.bf16.mxu0 0
      %747 = vmatpush1.bf16.msra.mxu0 0
      %748 = vmatprep.subr.bf16.mxu0 0
      %749 = vmatpush1.bf16.msra.mxu0 0
      %750 = vmatprep.subr.bf16.mxu0 0
      %751 = vmatpush1.bf16.msra.mxu0 0
      %752 = vmatprep.subr.bf16.mxu0 0
      %753 = vmatpush1.bf16.msra.mxu0 0
      %754 = vmatprep.subr.bf16.mxu0 0
      %755 = vmatpush1.bf16.msra.mxu0 0
      %756 = vmatprep.subr.bf16.mxu0 0
      %757 = vmatpush1.bf16.msra.mxu0 0
      %758 = vmatprep.mubr.bf16.mxu0 0
      %759 = vmatmul.mubr.bf16.gmra.mrb[0].mxu0 %v672
      %v760 = vpop.f32.mrb[0].mxu0
      %v761 = vadd.f32 0.0, %v760
      %v762 = vpop.f32.mrb[0].mxu0
      %v763 = vpop.f32.mrb[0].mxu0
      %v764 = vadd.f32 0.0, %v763
      %v765 = vpop.f32.mrb[0].mxu0
      %766 = vdwg.mxu0
      %v767 = vadd.f32 %v677, %v761
      %v768 = vadd.f32 %v677, %v764
      %v770 = vshrl.u32 %v672, 16
      %v772 = vshll.u32 %v672, 16
      %v774 = vrot.slane %v772, 1
      %v775 = vor.u32 %v770, %v774
      %v777 = vshll.u32 %v673, 16
      %v779 = vrot.slane %v777, 1
      %v780 = vsel %vm410, %v775, %v779
      %v798 = vunpack.c.l.b16 %v633
      %v799 = vunpack.c.l.b16 %v634
      %v800 = vunpack.c.l.b16 %v635
      %v801 = vunpack.c.l.b16 %v636
      %v802 = vunpack.c.l.b16 %v637
      %v803 = vunpack.c.l.b16 %v638
      %v804 = vunpack.c.l.b16 %v639
      %v805 = vunpack.c.l.b16 %v640
      %v806 = vunpack.c.l.b16 %v641
      %v807 = vunpack.c.l.b16 %v642
      %v808 = vunpack.c.l.b16 %v643
      %v809 = vunpack.c.l.b16 %v644
      %v810 = vunpack.c.l.b16 %v645
      %v811 = vunpack.c.l.b16 %v646
      %v812 = vunpack.c.l.b16 %v647
      %v813 = vunpack.c.l.b16 %v648
      %v814 = vpack.c.b16 %v799, %v798
      %v815 = vpack.c.b16 %v801, %v800
      %v816 = vpack.c.b16 %v803, %v802
      %v817 = vpack.c.b16 %v805, %v804
      %v818 = vpack.c.b16 %v807, %v806
      %v819 = vpack.c.b16 %v809, %v808
      %v820 = vpack.c.b16 %v811, %v810
      %v821 = vpack.c.b16 %v813, %v812
      %830 = vmatprep.subr.bf16.mxu0 0
      %831 = vmatpush1.bf16.msra.mxu0 %v814
      %832 = vmatprep.subr.bf16.mxu0 0
      %833 = vmatpush1.bf16.msra.mxu0 %v815
      %834 = vmatprep.subr.bf16.mxu0 0
      %835 = vmatpush1.bf16.msra.mxu0 %v816
      %836 = vmatprep.subr.bf16.mxu0 0
      %837 = vmatpush1.bf16.msra.mxu0 %v817
      %838 = vmatprep.subr.bf16.mxu0 0
      %839 = vmatpush1.bf16.msra.mxu0 %v818
      %840 = vmatprep.subr.bf16.mxu0 0
      %841 = vmatpush1.bf16.msra.mxu0 %v819
      %842 = vmatprep.subr.bf16.mxu0 0
      %843 = vmatpush1.bf16.msra.mxu0 %v820
      %844 = vmatprep.subr.bf16.mxu0 0
      %845 = vmatpush1.bf16.msra.mxu0 %v821
      %846 = vmatprep.subr.bf16.mxu0 0
      %847 = vmatpush1.bf16.msra.mxu0 0
      %848 = vmatprep.subr.bf16.mxu0 0
      %849 = vmatpush1.bf16.msra.mxu0 0
      %850 = vmatprep.subr.bf16.mxu0 0
      %851 = vmatpush1.bf16.msra.mxu0 0
      %852 = vmatprep.subr.bf16.mxu0 0
      %853 = vmatpush1.bf16.msra.mxu0 0
      %854 = vmatprep.subr.bf16.mxu0 0
      %855 = vmatpush1.bf16.msra.mxu0 0
      %856 = vmatprep.subr.bf16.mxu0 0
      %857 = vmatpush1.bf16.msra.mxu0 0
      %858 = vmatprep.subr.bf16.mxu0 0
      %859 = vmatpush1.bf16.msra.mxu0 0
      %860 = vmatprep.subr.bf16.mxu0 0
      %861 = vmatpush1.bf16.msra.mxu0 0
      %862 = vmatprep.mubr.bf16.mxu0 0
      %863 = vmatmul.mubr.bf16.gmra.mrb[0].mxu0 %v780
      %v864 = vpop.f32.mrb[0].mxu0
      %v865 = vadd.f32 0.0, %v864
      %v866 = vpop.f32.mrb[0].mxu0
      %v867 = vpop.f32.mrb[0].mxu0
      %v868 = vadd.f32 0.0, %v867
      %v869 = vpop.f32.mrb[0].mxu0
      %870 = vdwg.mxu0
      %v871 = vadd.f32 %v767, %v865
      %v872 = vadd.f32 %v768, %v868
      %v875 = vrot.slane %v672, 1
      %v876 = vrot.slane %v673, 1
      %v877 = vsel %vm517, %v875, %v876
      %v895 = vunpack.c.l.b16 %v650
      %v896 = vunpack.c.l.b16 %v651
      %v897 = vunpack.c.l.b16 %v652
      %v898 = vunpack.c.l.b16 %v653
      %v899 = vunpack.c.l.b16 %v654
      %v900 = vunpack.c.l.b16 %v655
      %v901 = vunpack.c.l.b16 %v656
      %v902 = vunpack.c.l.b16 %v657
      %v903 = vunpack.c.l.b16 %v658
      %v904 = vunpack.c.l.b16 %v659
      %v905 = vunpack.c.l.b16 %v660
      %v906 = vunpack.c.l.b16 %v661
      %v907 = vunpack.c.l.b16 %v662
      %v908 = vunpack.c.l.b16 %v663
      %v909 = vunpack.c.l.b16 %v664
      %v910 = vunpack.c.l.b16 %v665
      %v911 = vpack.c.b16 %v896, %v895
      %v912 = vpack.c.b16 %v898, %v897
      %v913 = vpack.c.b16 %v900, %v899
      %v914 = vpack.c.b16 %v902, %v901
      %v915 = vpack.c.b16 %v904, %v903
      %v916 = vpack.c.b16 %v906, %v905
      %v917 = vpack.c.b16 %v908, %v907
      %v918 = vpack.c.b16 %v910, %v909
      %927 = vmatprep.subr.bf16.mxu0 0
      %928 = vmatpush1.bf16.msra.mxu0 %v911
      %929 = vmatprep.subr.bf16.mxu0 0
      %930 = vmatpush1.bf16.msra.mxu0 %v912
      %931 = vmatprep.subr.bf16.mxu0 0
      %932 = vmatpush1.bf16.msra.mxu0 %v913
      %933 = vmatprep.subr.bf16.mxu0 0
      %934 = vmatpush1.bf16.msra.mxu0 %v914
      %935 = vmatprep.subr.bf16.mxu0 0
      %936 = vmatpush1.bf16.msra.mxu0 %v915
      %937 = vmatprep.subr.bf16.mxu0 0
      %938 = vmatpush1.bf16.msra.mxu0 %v916
      %939 = vmatprep.subr.bf16.mxu0 0
      %940 = vmatpush1.bf16.msra.mxu0 %v917
      %941 = vmatprep.subr.bf16.mxu0 0
      %942 = vmatpush1.bf16.msra.mxu0 %v918
      %943 = vmatprep.subr.bf16.mxu0 0
      %944 = vmatpush1.bf16.msra.mxu0 0
      %945 = vmatprep.subr.bf16.mxu0 0
      %946 = vmatpush1.bf16.msra.mxu0 0
      %947 = vmatprep.subr.bf16.mxu0 0
      %948 = vmatpush1.bf16.msra.mxu0 0
      %949 = vmatprep.subr.bf16.mxu0 0
      %950 = vmatpush1.bf16.msra.mxu0 0
      %951 = vmatprep.subr.bf16.mxu0 0
      %952 = vmatpush1.bf16.msra.mxu0 0
      %953 = vmatprep.subr.bf16.mxu0 0
      %954 = vmatpush1.bf16.msra.mxu0 0
      %955 = vmatprep.subr.bf16.mxu0 0
      %956 = vmatpush1.bf16.msra.mxu0 0
      %957 = vmatprep.subr.bf16.mxu0 0
      %958 = vmatpush1.bf16.msra.mxu0 0
      %959 = vmatprep.mubr.bf16.mxu0 0
      %960 = vmatmul.mubr.bf16.gmra.mrb[0].mxu0 %v877
      %v961 = vpop.f32.mrb[0].mxu0
      %v962 = vadd.f32 0.0, %v961
      %v963 = vpop.f32.mrb[0].mxu0
      %v964 = vpop.f32.mrb[0].mxu0
      %v965 = vadd.f32 0.0, %v964
      %v966 = vpop.f32.mrb[0].mxu0
      %967 = vdwg.mxu0
      %v968 = vadd.f32 %v871, %v962
      %v969 = vadd.f32 %v872, %v965
      %v970 = vmax.f32 %v968, 0.0
      %v971 = vmax.f32 %v969, 0.0
      %v972 = vld [vmem:[%s2] sm:$0xf]
      %v973 = vld [vmem:[%s2 + $0x4] sm:$0xf]
      %v974 = vld [vmem:[%s2 + $0x8] sm:$0xf]
      %v975 = vld [vmem:[%s2 + $0xc] sm:$0xf]
      %v976 = vld [vmem:[%s2 + $0x10] sm:$0xf]
      %v977 = vld [vmem:[%s2 + $0x14] sm:$0xf]
      %v978 = vld [vmem:[%s2 + $0x18] sm:$0xf]
      %v979 = vld [vmem:[%s2 + $0x1c] sm:$0xf]
      %v980 = vld [vmem:[%s2 + $0x20] sm:$0xf]
      %v981 = vld [vmem:[%s2 + $0x24] sm:$0xf]
      %v982 = vld [vmem:[%s2 + $0x28] sm:$0xf]
      %v983 = vld [vmem:[%s2 + $0x2c] sm:$0xf]
      %v984 = vld [vmem:[%s2 + $0x30] sm:$0xf]
      %v985 = vld [vmem:[%s2 + $0x34] sm:$0xf]
      %v986 = vld [vmem:[%s2 + $0x38] sm:$0xf]
      %v987 = vld [vmem:[%s2 + $0x3c] sm:$0xf]
      %s988 = scalar_lea.vmem %s2, 64
      %v989 = vld [vmem:[%s988] sm:$0xf]
      %v990 = vld [vmem:[%s988 + $0x4] sm:$0xf]
      %v991 = vld [vmem:[%s988 + $0x8] sm:$0xf]
      %v992 = vld [vmem:[%s988 + $0xc] sm:$0xf]
      %v993 = vld [vmem:[%s988 + $0x10] sm:$0xf]
      %v994 = vld [vmem:[%s988 + $0x14] sm:$0xf]
      %v995 = vld [vmem:[%s988 + $0x18] sm:$0xf]
      %v996 = vld [vmem:[%s988 + $0x1c] sm:$0xf]
      %v997 = vld [vmem:[%s988 + $0x20] sm:$0xf]
      %v998 = vld [vmem:[%s988 + $0x24] sm:$0xf]
      %v999 = vld [vmem:[%s988 + $0x28] sm:$0xf]
      %v1000 = vld [vmem:[%s988 + $0x2c] sm:$0xf]
      %v1001 = vld [vmem:[%s988 + $0x30] sm:$0xf]
      %v1002 = vld [vmem:[%s988 + $0x34] sm:$0xf]
      %v1003 = vld [vmem:[%s988 + $0x38] sm:$0xf]
      %v1004 = vld [vmem:[%s988 + $0x3c] sm:$0xf]
      %s1005 = scalar_lea.vmem %s2, 128
      %v1006 = vld [vmem:[%s1005] sm:$0xf]
      %v1007 = vld [vmem:[%s1005 + $0x4] sm:$0xf]
      %v1008 = vld [vmem:[%s1005 + $0x8] sm:$0xf]
      %v1009 = vld [vmem:[%s1005 + $0xc] sm:$0xf]
      %v1010 = vld [vmem:[%s1005 + $0x10] sm:$0xf]
      %v1011 = vld [vmem:[%s1005 + $0x14] sm:$0xf]
      %v1012 = vld [vmem:[%s1005 + $0x18] sm:$0xf]
      %v1013 = vld [vmem:[%s1005 + $0x1c] sm:$0xf]
      %v1014 = vld [vmem:[%s1005 + $0x20] sm:$0xf]
      %v1015 = vld [vmem:[%s1005 + $0x24] sm:$0xf]
      %v1016 = vld [vmem:[%s1005 + $0x28] sm:$0xf]
      %v1017 = vld [vmem:[%s1005 + $0x2c] sm:$0xf]
      %v1018 = vld [vmem:[%s1005 + $0x30] sm:$0xf]
      %v1019 = vld [vmem:[%s1005 + $0x34] sm:$0xf]
      %v1020 = vld [vmem:[%s1005 + $0x38] sm:$0xf]
      %v1021 = vld [vmem:[%s1005 + $0x3c] sm:$0xf]
      %s1022 = scalar_lea.vmem %s2, 192
      %v1023 = vld [vmem:[%s1022] sm:$0xf]
      %v1024 = vld [vmem:[%s1022 + $0x4] sm:$0xf]
      %v1025 = vld [vmem:[%s1022 + $0x8] sm:$0xf]
      %v1026 = vld [vmem:[%s1022 + $0xc] sm:$0xf]
      %v1027 = vld [vmem:[%s1022 + $0x10] sm:$0xf]
      %v1028 = vld [vmem:[%s1022 + $0x14] sm:$0xf]
      %v1029 = vld [vmem:[%s1022 + $0x18] sm:$0xf]
      %v1030 = vld [vmem:[%s1022 + $0x1c] sm:$0xf]
      %v1031 = vld [vmem:[%s1022 + $0x20] sm:$0xf]
      %v1032 = vld [vmem:[%s1022 + $0x24] sm:$0xf]
      %v1033 = vld [vmem:[%s1022 + $0x28] sm:$0xf]
      %v1034 = vld [vmem:[%s1022 + $0x2c] sm:$0xf]
      %v1035 = vld [vmem:[%s1022 + $0x30] sm:$0xf]
      %v1036 = vld [vmem:[%s1022 + $0x34] sm:$0xf]
      %v1037 = vld [vmem:[%s1022 + $0x38] sm:$0xf]
      %v1038 = vld [vmem:[%s1022 + $0x3c] sm:$0xf]
      %s1039 = scalar_lea.vmem %s2, 256
      %v1040 = vld [vmem:[%s1039] sm:$0xf]
      %v1041 = vld [vmem:[%s1039 + $0x4] sm:$0xf]
      %v1042 = vld [vmem:[%s1039 + $0x8] sm:$0xf]
      %v1043 = vld [vmem:[%s1039 + $0xc] sm:$0xf]
      %v1044 = vld [vmem:[%s1039 + $0x10] sm:$0xf]
      %v1045 = vld [vmem:[%s1039 + $0x14] sm:$0xf]
      %v1046 = vld [vmem:[%s1039 + $0x18] sm:$0xf]
      %v1047 = vld [vmem:[%s1039 + $0x1c] sm:$0xf]
      %v1048 = vld [vmem:[%s1039 + $0x20] sm:$0xf]
      %v1049 = vld [vmem:[%s1039 + $0x24] sm:$0xf]
      %v1050 = vld [vmem:[%s1039 + $0x28] sm:$0xf]
      %v1051 = vld [vmem:[%s1039 + $0x2c] sm:$0xf]
      %v1052 = vld [vmem:[%s1039 + $0x30] sm:$0xf]
      %v1053 = vld [vmem:[%s1039 + $0x34] sm:$0xf]
      %v1054 = vld [vmem:[%s1039 + $0x38] sm:$0xf]
      %v1055 = vld [vmem:[%s1039 + $0x3c] sm:$0xf]
      %s1056 = scalar_lea.vmem %s2, 320
      %v1057 = vld [vmem:[%s1056] sm:$0xf]
      %v1058 = vld [vmem:[%s1056 + $0x4] sm:$0xf]
      %v1059 = vld [vmem:[%s1056 + $0x8] sm:$0xf]
      %v1060 = vld [vmem:[%s1056 + $0xc] sm:$0xf]
      %v1061 = vld [vmem:[%s1056 + $0x10] sm:$0xf]
      %v1062 = vld [vmem:[%s1056 + $0x14] sm:$0xf]
      %v1063 = vld [vmem:[%s1056 + $0x18] sm:$0xf]
      %v1064 = vld [vmem:[%s1056 + $0x1c] sm:$0xf]
      %v1065 = vld [vmem:[%s1056 + $0x20] sm:$0xf]
      %v1066 = vld [vmem:[%s1056 + $0x24] sm:$0xf]
      %v1067 = vld [vmem:[%s1056 + $0x28] sm:$0xf]
      %v1068 = vld [vmem:[%s1056 + $0x2c] sm:$0xf]
      %v1069 = vld [vmem:[%s1056 + $0x30] sm:$0xf]
      %v1070 = vld [vmem:[%s1056 + $0x34] sm:$0xf]
      %v1071 = vld [vmem:[%s1056 + $0x38] sm:$0xf]
      %v1072 = vld [vmem:[%s1056 + $0x3c] sm:$0xf]
      %s1073 = scalar_lea.vmem %s2, 384
      %v1074 = vld [vmem:[%s1073] sm:$0xf]
      %v1075 = vld [vmem:[%s1073 + $0x4] sm:$0xf]
      %v1076 = vld [vmem:[%s1073 + $0x8] sm:$0xf]
      %v1077 = vld [vmem:[%s1073 + $0xc] sm:$0xf]
      %v1078 = vld [vmem:[%s1073 + $0x10] sm:$0xf]
      %v1079 = vld [vmem:[%s1073 + $0x14] sm:$0xf]
      %v1080 = vld [vmem:[%s1073 + $0x18] sm:$0xf]
      %v1081 = vld [vmem:[%s1073 + $0x1c] sm:$0xf]
      %v1082 = vld [vmem:[%s1073 + $0x20] sm:$0xf]
      %v1083 = vld [vmem:[%s1073 + $0x24] sm:$0xf]
      %v1084 = vld [vmem:[%s1073 + $0x28] sm:$0xf]
      %v1085 = vld [vmem:[%s1073 + $0x2c] sm:$0xf]
      %v1086 = vld [vmem:[%s1073 + $0x30] sm:$0xf]
      %v1087 = vld [vmem:[%s1073 + $0x34] sm:$0xf]
      %v1088 = vld [vmem:[%s1073 + $0x38] sm:$0xf]
      %v1089 = vld [vmem:[%s1073 + $0x3c] sm:$0xf]
      %v1090 = vld [vmem:[%s5] sm:$0x1]
      %1091 = vst [vmem:[#allocation2 + $0x3] sm:$0xff] %v970
      %1092 = vst [vmem:[#allocation2 + $0xb] sm:$0xff] %v971
      %v1093 = vld [vmem:[#allocation2] sm:$0xff]
      %v1094 = vld [vmem:[#allocation2 + $0x8] sm:$0xff]
      %v1095 = vld [vmem:[#allocation2 + $0x10] sm:$0x3f]
      %v1096 = vpack.c.bf16 %v1094, %v1093
      %v1097 = vpack.c.bf16 %v1095, %v1095
      %v1098 = vlaneseq
      %v1099 = vshrl.u32 %v1098, 7
      %v1100 = vsub.s32 0, %v1099
      %v1101 = vrot.slane %v1090, %v1100
      %v1118 = vunpack.c.l.b16 %v972
      %v1119 = vunpack.c.l.b16 %v973
      %v1120 = vunpack.c.l.b16 %v974
      %v1121 = vunpack.c.l.b16 %v975
      %v1122 = vunpack.c.l.b16 %v976
      %v1123 = vunpack.c.l.b16 %v977
      %v1124 = vunpack.c.l.b16 %v978
      %v1125 = vunpack.c.l.b16 %v979
      %v1126 = vunpack.c.l.b16 %v980
      %v1127 = vunpack.c.l.b16 %v981
      %v1128 = vunpack.c.l.b16 %v982
      %v1129 = vunpack.c.l.b16 %v983
      %v1130 = vunpack.c.l.b16 %v984
      %v1131 = vunpack.c.l.b16 %v985
      %v1132 = vunpack.c.l.b16 %v986
      %v1133 = vunpack.c.l.b16 %v987
      %v1134 = vpack.c.b16 %v1119, %v1118
      %v1135 = vpack.c.b16 %v1121, %v1120
      %v1136 = vpack.c.b16 %v1123, %v1122
      %v1137 = vpack.c.b16 %v1125, %v1124
      %v1138 = vpack.c.b16 %v1127, %v1126
      %v1139 = vpack.c.b16 %v1129, %v1128
      %v1140 = vpack.c.b16 %v1131, %v1130
      %v1141 = vpack.c.b16 %v1133, %v1132
      %1150 = vmatprep.subr.bf16.mxu0 0
      %1151 = vmatpush1.bf16.msra.mxu0 %v1134
      %1152 = vmatprep.subr.bf16.mxu0 0
      %1153 = vmatpush1.bf16.msra.mxu0 %v1135
      %1154 = vmatprep.subr.bf16.mxu0 0
      %1155 = vmatpush1.bf16.msra.mxu0 %v1136
      %1156 = vmatprep.subr.bf16.mxu0 0
      %1157 = vmatpush1.bf16.msra.mxu0 %v1137
      %1158 = vmatprep.subr.bf16.mxu0 0
      %1159 = vmatpush1.bf16.msra.mxu0 %v1138
      %1160 = vmatprep.subr.bf16.mxu0 0
      %1161 = vmatpush1.bf16.msra.mxu0 %v1139
      %1162 = vmatprep.subr.bf16.mxu0 0
      %1163 = vmatpush1.bf16.msra.mxu0 %v1140
      %1164 = vmatprep.subr.bf16.mxu0 0
      %1165 = vmatpush1.bf16.msra.mxu0 %v1141
      %1166 = vmatprep.subr.bf16.mxu0 0
      %1167 = vmatpush1.bf16.msra.mxu0 0
      %1168 = vmatprep.subr.bf16.mxu0 0
      %1169 = vmatpush1.bf16.msra.mxu0 0
      %1170 = vmatprep.subr.bf16.mxu0 0
      %1171 = vmatpush1.bf16.msra.mxu0 0
      %1172 = vmatprep.subr.bf16.mxu0 0
      %1173 = vmatpush1.bf16.msra.mxu0 0
      %1174 = vmatprep.subr.bf16.mxu0 0
      %1175 = vmatpush1.bf16.msra.mxu0 0
      %1176 = vmatprep.subr.bf16.mxu0 0
      %1177 = vmatpush1.bf16.msra.mxu0 0
      %1178 = vmatprep.subr.bf16.mxu0 0
      %1179 = vmatpush1.bf16.msra.mxu0 0
      %1180 = vmatprep.subr.bf16.mxu0 0
      %1181 = vmatpush1.bf16.msra.mxu0 0
      %1182 = vmatprep.mubr.bf16.mxu0 0
      %1183 = vmatmul.mubr.bf16.gmra.mrb[0].mxu0 %v1096
      %v1184 = vpop.f32.mrb[0].mxu0
      %v1185 = vadd.f32 0.0, %v1184
      %v1186 = vpop.f32.mrb[0].mxu0
      %v1187 = vpop.f32.mrb[0].mxu0
      %v1188 = vadd.f32 0.0, %v1187
      %v1189 = vpop.f32.mrb[0].mxu0
      %1190 = vdwg.mxu0
      %v1191 = vadd.f32 %v1101, %v1185
      %v1192 = vadd.f32 %v1101, %v1188
      %v1194 = vshrl.u32 %v1096, 16
      %v1196 = vshll.u32 %v1096, 16
      %v1198 = vrot.slane %v1196, 1
      %v1199 = vor.u32 %v1194, %v1198
      %v1201 = vshll.u32 %v1097, 16
      %v1203 = vrot.slane %v1201, 1
      %v1204 = vsel %vm410, %v1199, %v1203
      %v1222 = vunpack.c.l.b16 %v989
      %v1223 = vunpack.c.l.b16 %v990
      %v1224 = vunpack.c.l.b16 %v991
      %v1225 = vunpack.c.l.b16 %v992
      %v1226 = vunpack.c.l.b16 %v993
      %v1227 = vunpack.c.l.b16 %v994
      %v1228 = vunpack.c.l.b16 %v995
      %v1229 = vunpack.c.l.b16 %v996
      %v1230 = vunpack.c.l.b16 %v997
      %v1231 = vunpack.c.l.b16 %v998
      %v1232 = vunpack.c.l.b16 %v999
      %v1233 = vunpack.c.l.b16 %v1000
      %v1234 = vunpack.c.l.b16 %v1001
      %v1235 = vunpack.c.l.b16 %v1002
      %v1236 = vunpack.c.l.b16 %v1003
      %v1237 = vunpack.c.l.b16 %v1004
      %v1238 = vpack.c.b16 %v1223, %v1222
      %v1239 = vpack.c.b16 %v1225, %v1224
      %v1240 = vpack.c.b16 %v1227, %v1226
      %v1241 = vpack.c.b16 %v1229, %v1228
      %v1242 = vpack.c.b16 %v1231, %v1230
      %v1243 = vpack.c.b16 %v1233, %v1232
      %v1244 = vpack.c.b16 %v1235, %v1234
      %v1245 = vpack.c.b16 %v1237, %v1236
      %1254 = vmatprep.subr.bf16.mxu0 0
      %1255 = vmatpush1.bf16.msra.mxu0 %v1238
      %1256 = vmatprep.subr.bf16.mxu0 0
      %1257 = vmatpush1.bf16.msra.mxu0 %v1239
      %1258 = vmatprep.subr.bf16.mxu0 0
      %1259 = vmatpush1.bf16.msra.mxu0 %v1240
      %1260 = vmatprep.subr.bf16.mxu0 0
      %1261 = vmatpush1.bf16.msra.mxu0 %v1241
      %1262 = vmatprep.subr.bf16.mxu0 0
      %1263 = vmatpush1.bf16.msra.mxu0 %v1242
      %1264 = vmatprep.subr.bf16.mxu0 0
      %1265 = vmatpush1.bf16.msra.mxu0 %v1243
      %1266 = vmatprep.subr.bf16.mxu0 0
      %1267 = vmatpush1.bf16.msra.mxu0 %v1244
      %1268 = vmatprep.subr.bf16.mxu0 0
      %1269 = vmatpush1.bf16.msra.mxu0 %v1245
      %1270 = vmatprep.subr.bf16.mxu0 0
      %1271 = vmatpush1.bf16.msra.mxu0 0
      %1272 = vmatprep.subr.bf16.mxu0 0
      %1273 = vmatpush1.bf16.msra.mxu0 0
      %1274 = vmatprep.subr.bf16.mxu0 0
      %1275 = vmatpush1.bf16.msra.mxu0 0
      %1276 = vmatprep.subr.bf16.mxu0 0
      %1277 = vmatpush1.bf16.msra.mxu0 0
      %1278 = vmatprep.subr.bf16.mxu0 0
      %1279 = vmatpush1.bf16.msra.mxu0 0
      %1280 = vmatprep.subr.bf16.mxu0 0
      %1281 = vmatpush1.bf16.msra.mxu0 0
      %1282 = vmatprep.subr.bf16.mxu0 0
      %1283 = vmatpush1.bf16.msra.mxu0 0
      %1284 = vmatprep.subr.bf16.mxu0 0
      %1285 = vmatpush1.bf16.msra.mxu0 0
      %1286 = vmatprep.mubr.bf16.mxu0 0
      %1287 = vmatmul.mubr.bf16.gmra.mrb[0].mxu0 %v1204
      %v1288 = vpop.f32.mrb[0].mxu0
      %v1289 = vadd.f32 0.0, %v1288
      %v1290 = vpop.f32.mrb[0].mxu0
      %v1291 = vpop.f32.mrb[0].mxu0
      %v1292 = vadd.f32 0.0, %v1291
      %v1293 = vpop.f32.mrb[0].mxu0
      %1294 = vdwg.mxu0
      %v1295 = vadd.f32 %v1191, %v1289
      %v1296 = vadd.f32 %v1192, %v1292
      %v1299 = vrot.slane %v1096, 1
      %v1300 = vrot.slane %v1097, 1
      %v1301 = vsel %vm517, %v1299, %v1300
      %v1319 = vunpack.c.l.b16 %v1006
      %v1320 = vunpack.c.l.b16 %v1007
      %v1321 = vunpack.c.l.b16 %v1008
      %v1322 = vunpack.c.l.b16 %v1009
      %v1323 = vunpack.c.l.b16 %v1010
      %v1324 = vunpack.c.l.b16 %v1011
      %v1325 = vunpack.c.l.b16 %v1012
      %v1326 = vunpack.c.l.b16 %v1013
      %v1327 = vunpack.c.l.b16 %v1014
      %v1328 = vunpack.c.l.b16 %v1015
      %v1329 = vunpack.c.l.b16 %v1016
      %v1330 = vunpack.c.l.b16 %v1017
      %v1331 = vunpack.c.l.b16 %v1018
      %v1332 = vunpack.c.l.b16 %v1019
      %v1333 = vunpack.c.l.b16 %v1020
      %v1334 = vunpack.c.l.b16 %v1021
      %v1335 = vpack.c.b16 %v1320, %v1319
      %v1336 = vpack.c.b16 %v1322, %v1321
      %v1337 = vpack.c.b16 %v1324, %v1323
      %v1338 = vpack.c.b16 %v1326, %v1325
      %v1339 = vpack.c.b16 %v1328, %v1327
      %v1340 = vpack.c.b16 %v1330, %v1329
      %v1341 = vpack.c.b16 %v1332, %v1331
      %v1342 = vpack.c.b16 %v1334, %v1333
      %1351 = vmatprep.subr.bf16.mxu0 0
      %1352 = vmatpush1.bf16.msra.mxu0 %v1335
      %1353 = vmatprep.subr.bf16.mxu0 0
      %1354 = vmatpush1.bf16.msra.mxu0 %v1336
      %1355 = vmatprep.subr.bf16.mxu0 0
      %1356 = vmatpush1.bf16.msra.mxu0 %v1337
      %1357 = vmatprep.subr.bf16.mxu0 0
      %1358 = vmatpush1.bf16.msra.mxu0 %v1338
      %1359 = vmatprep.subr.bf16.mxu0 0
      %1360 = vmatpush1.bf16.msra.mxu0 %v1339
      %1361 = vmatprep.subr.bf16.mxu0 0
      %1362 = vmatpush1.bf16.msra.mxu0 %v1340
      %1363 = vmatprep.subr.bf16.mxu0 0
      %1364 = vmatpush1.bf16.msra.mxu0 %v1341
      %1365 = vmatprep.subr.bf16.mxu0 0
      %1366 = vmatpush1.bf16.msra.mxu0 %v1342
      %1367 = vmatprep.subr.bf16.mxu0 0
      %1368 = vmatpush1.bf16.msra.mxu0 0
      %1369 = vmatprep.subr.bf16.mxu0 0
      %1370 = vmatpush1.bf16.msra.mxu0 0
      %1371 = vmatprep.subr.bf16.mxu0 0
      %1372 = vmatpush1.bf16.msra.mxu0 0
      %1373 = vmatprep.subr.bf16.mxu0 0
      %1374 = vmatpush1.bf16.msra.mxu0 0
      %1375 = vmatprep.subr.bf16.mxu0 0
      %1376 = vmatpush1.bf16.msra.mxu0 0
      %1377 = vmatprep.subr.bf16.mxu0 0
      %1378 = vmatpush1.bf16.msra.mxu0 0
      %1379 = vmatprep.subr.bf16.mxu0 0
      %1380 = vmatpush1.bf16.msra.mxu0 0
      %1381 = vmatprep.subr.bf16.mxu0 0
      %1382 = vmatpush1.bf16.msra.mxu0 0
      %1383 = vmatprep.mubr.bf16.mxu0 0
      %1384 = vmatmul.mubr.bf16.gmra.mrb[0].mxu0 %v1301
      %v1385 = vpop.f32.mrb[0].mxu0
      %v1386 = vadd.f32 0.0, %v1385
      %v1387 = vpop.f32.mrb[0].mxu0
      %v1388 = vpop.f32.mrb[0].mxu0
      %v1389 = vadd.f32 0.0, %v1388
      %v1390 = vpop.f32.mrb[0].mxu0
      %1391 = vdwg.mxu0
      %v1392 = vadd.f32 %v1295, %v1386
      %v1393 = vadd.f32 %v1296, %v1389
      %vm1394 = vsmask.f32 6400
      %v1395 = vrot.slane %v1194, 1
      %v1396 = vrot.slane %v1196, 2
      %v1397 = vor.u32 %v1395, %v1396
      %v1398 = vshrl.u32 %v1097, 16
      %v1400 = vrot.slane %v1398, 1
      %v1401 = vrot.slane %v1201, 2
      %v1402 = vor.u32 %v1400, %v1401
      %v1403 = vsel %vm1394, %v1397, %v1402
      %v1421 = vunpack.c.l.b16 %v1023
      %v1422 = vunpack.c.l.b16 %v1024
      %v1423 = vunpack.c.l.b16 %v1025
      %v1424 = vunpack.c.l.b16 %v1026
      %v1425 = vunpack.c.l.b16 %v1027
      %v1426 = vunpack.c.l.b16 %v1028
      %v1427 = vunpack.c.l.b16 %v1029
      %v1428 = vunpack.c.l.b16 %v1030
      %v1429 = vunpack.c.l.b16 %v1031
      %v1430 = vunpack.c.l.b16 %v1032
      %v1431 = vunpack.c.l.b16 %v1033
      %v1432 = vunpack.c.l.b16 %v1034
      %v1433 = vunpack.c.l.b16 %v1035
      %v1434 = vunpack.c.l.b16 %v1036
      %v1435 = vunpack.c.l.b16 %v1037
      %v1436 = vunpack.c.l.b16 %v1038
      %v1437 = vpack.c.b16 %v1422, %v1421
      %v1438 = vpack.c.b16 %v1424, %v1423
      %v1439 = vpack.c.b16 %v1426, %v1425
      %v1440 = vpack.c.b16 %v1428, %v1427
      %v1441 = vpack.c.b16 %v1430, %v1429
      %v1442 = vpack.c.b16 %v1432, %v1431
      %v1443 = vpack.c.b16 %v1434, %v1433
      %v1444 = vpack.c.b16 %v1436, %v1435
      %1453 = vmatprep.subr.bf16.mxu0 0
      %1454 = vmatpush1.bf16.msra.mxu0 %v1437
      %1455 = vmatprep.subr.bf16.mxu0 0
      %1456 = vmatpush1.bf16.msra.mxu0 %v1438
      %1457 = vmatprep.subr.bf16.mxu0 0
      %1458 = vmatpush1.bf16.msra.mxu0 %v1439
      %1459 = vmatprep.subr.bf16.mxu0 0
      %1460 = vmatpush1.bf16.msra.mxu0 %v1440
      %1461 = vmatprep.subr.bf16.mxu0 0
      %1462 = vmatpush1.bf16.msra.mxu0 %v1441
      %1463 = vmatprep.subr.bf16.mxu0 0
      %1464 = vmatpush1.bf16.msra.mxu0 %v1442
      %1465 = vmatprep.subr.bf16.mxu0 0
      %1466 = vmatpush1.bf16.msra.mxu0 %v1443
      %1467 = vmatprep.subr.bf16.mxu0 0
      %1468 = vmatpush1.bf16.msra.mxu0 %v1444
      %1469 = vmatprep.subr.bf16.mxu0 0
      %1470 = vmatpush1.bf16.msra.mxu0 0
      %1471 = vmatprep.subr.bf16.mxu0 0
      %1472 = vmatpush1.bf16.msra.mxu0 0
      %1473 = vmatprep.subr.bf16.mxu0 0
      %1474 = vmatpush1.bf16.msra.mxu0 0
      %1475 = vmatprep.subr.bf16.mxu0 0
      %1476 = vmatpush1.bf16.msra.mxu0 0
      %1477 = vmatprep.subr.bf16.mxu0 0
      %1478 = vmatpush1.bf16.msra.mxu0 0
      %1479 = vmatprep.subr.bf16.mxu0 0
      %1480 = vmatpush1.bf16.msra.mxu0 0
      %1481 = vmatprep.subr.bf16.mxu0 0
      %1482 = vmatpush1.bf16.msra.mxu0 0
      %1483 = vmatprep.subr.bf16.mxu0 0
      %1484 = vmatpush1.bf16.msra.mxu0 0
      %1485 = vmatprep.mubr.bf16.mxu0 0
      %1486 = vmatmul.mubr.bf16.gmra.mrb[0].mxu0 %v1403
      %v1487 = vpop.f32.mrb[0].mxu0
      %v1488 = vadd.f32 0.0, %v1487
      %v1489 = vpop.f32.mrb[0].mxu0
      %v1490 = vpop.f32.mrb[0].mxu0
      %v1491 = vadd.f32 0.0, %v1490
      %v1492 = vpop.f32.mrb[0].mxu0
      %1493 = vdwg.mxu0
      %v1494 = vadd.f32 %v1392, %v1488
      %v1495 = vadd.f32 %v1393, %v1491
      %vm1496 = vcmask 1045504
      %v1497 = vrot.slane %v1096, 2
      %v1498 = vrot.slane %v1097, 2
      %v1499 = vsel %vm1496, %v1497, %v1498
      %v1517 = vunpack.c.l.b16 %v1040
      %v1518 = vunpack.c.l.b16 %v1041
      %v1519 = vunpack.c.l.b16 %v1042
      %v1520 = vunpack.c.l.b16 %v1043
      %v1521 = vunpack.c.l.b16 %v1044
      %v1522 = vunpack.c.l.b16 %v1045
      %v1523 = vunpack.c.l.b16 %v1046
      %v1524 = vunpack.c.l.b16 %v1047
      %v1525 = vunpack.c.l.b16 %v1048
      %v1526 = vunpack.c.l.b16 %v1049
      %v1527 = vunpack.c.l.b16 %v1050
      %v1528 = vunpack.c.l.b16 %v1051
      %v1529 = vunpack.c.l.b16 %v1052
      %v1530 = vunpack.c.l.b16 %v1053
      %v1531 = vunpack.c.l.b16 %v1054
      %v1532 = vunpack.c.l.b16 %v1055
      %v1533 = vpack.c.b16 %v1518, %v1517
      %v1534 = vpack.c.b16 %v1520, %v1519
      %v1535 = vpack.c.b16 %v1522, %v1521
      %v1536 = vpack.c.b16 %v1524, %v1523
      %v1537 = vpack.c.b16 %v1526, %v1525
      %v1538 = vpack.c.b16 %v1528, %v1527
      %v1539 = vpack.c.b16 %v1530, %v1529
      %v1540 = vpack.c.b16 %v1532, %v1531
      %1549 = vmatprep.subr.bf16.mxu0 0
      %1550 = vmatpush1.bf16.msra.mxu0 %v1533
      %1551 = vmatprep.subr.bf16.mxu0 0
      %1552 = vmatpush1.bf16.msra.mxu0 %v1534
      %1553 = vmatprep.subr.bf16.mxu0 0
      %1554 = vmatpush1.bf16.msra.mxu0 %v1535
      %1555 = vmatprep.subr.bf16.mxu0 0
      %1556 = vmatpush1.bf16.msra.mxu0 %v1536
      %1557 = vmatprep.subr.bf16.mxu0 0
      %1558 = vmatpush1.bf16.msra.mxu0 %v1537
      %1559 = vmatprep.subr.bf16.mxu0 0
      %1560 = vmatpush1.bf16.msra.mxu0 %v1538
      %1561 = vmatprep.subr.bf16.mxu0 0
      %1562 = vmatpush1.bf16.msra.mxu0 %v1539
      %1563 = vmatprep.subr.bf16.mxu0 0
      %1564 = vmatpush1.bf16.msra.mxu0 %v1540
      %1565 = vmatprep.subr.bf16.mxu0 0
      %1566 = vmatpush1.bf16.msra.mxu0 0
      %1567 = vmatprep.subr.bf16.mxu0 0
      %1568 = vmatpush1.bf16.msra.mxu0 0
      %1569 = vmatprep.subr.bf16.mxu0 0
      %1570 = vmatpush1.bf16.msra.mxu0 0
      %1571 = vmatprep.subr.bf16.mxu0 0
      %1572 = vmatpush1.bf16.msra.mxu0 0
      %1573 = vmatprep.subr.bf16.mxu0 0
      %1574 = vmatpush1.bf16.msra.mxu0 0
      %1575 = vmatprep.subr.bf16.mxu0 0
      %1576 = vmatpush1.bf16.msra.mxu0 0
      %1577 = vmatprep.subr.bf16.mxu0 0
      %1578 = vmatpush1.bf16.msra.mxu0 0
      %1579 = vmatprep.subr.bf16.mxu0 0
      %1580 = vmatpush1.bf16.msra.mxu0 0
      %1581 = vmatprep.mubr.bf16.mxu0 0
      %1582 = vmatmul.mubr.bf16.gmra.mrb[0].mxu0 %v1499
      %v1583 = vpop.f32.mrb[0].mxu0
      %v1584 = vadd.f32 0.0, %v1583
      %v1585 = vpop.f32.mrb[0].mxu0
      %v1586 = vpop.f32.mrb[0].mxu0
      %v1587 = vadd.f32 0.0, %v1586
      %v1588 = vpop.f32.mrb[0].mxu0
      %1589 = vdwg.mxu0
      %v1590 = vadd.f32 %v1494, %v1584
      %v1591 = vadd.f32 %v1495, %v1587
      %vm1592 = vsmask.f32 5376
      %v1593 = vrot.slane %v1194, 2
      %v1594 = vrot.slane %v1196, 3
      %v1595 = vor.u32 %v1593, %v1594
      %v1596 = vrot.slane %v1398, 2
      %v1597 = vrot.slane %v1201, 3
      %v1598 = vor.u32 %v1596, %v1597
      %v1599 = vsel %vm1592, %v1595, %v1598
      %v1617 = vunpack.c.l.b16 %v1057
      %v1618 = vunpack.c.l.b16 %v1058
      %v1619 = vunpack.c.l.b16 %v1059
      %v1620 = vunpack.c.l.b16 %v1060
      %v1621 = vunpack.c.l.b16 %v1061
      %v1622 = vunpack.c.l.b16 %v1062
      %v1623 = vunpack.c.l.b16 %v1063
      %v1624 = vunpack.c.l.b16 %v1064
      %v1625 = vunpack.c.l.b16 %v1065
      %v1626 = vunpack.c.l.b16 %v1066
      %v1627 = vunpack.c.l.b16 %v1067
      %v1628 = vunpack.c.l.b16 %v1068
      %v1629 = vunpack.c.l.b16 %v1069
      %v1630 = vunpack.c.l.b16 %v1070
      %v1631 = vunpack.c.l.b16 %v1071
      %v1632 = vunpack.c.l.b16 %v1072
      %v1633 = vpack.c.b16 %v1618, %v1617
      %v1634 = vpack.c.b16 %v1620, %v1619
      %v1635 = vpack.c.b16 %v1622, %v1621
      %v1636 = vpack.c.b16 %v1624, %v1623
      %v1637 = vpack.c.b16 %v1626, %v1625
      %v1638 = vpack.c.b16 %v1628, %v1627
      %v1639 = vpack.c.b16 %v1630, %v1629
      %v1640 = vpack.c.b16 %v1632, %v1631
      %1649 = vmatprep.subr.bf16.mxu0 0
      %1650 = vmatpush1.bf16.msra.mxu0 %v1633
      %1651 = vmatprep.subr.bf16.mxu0 0
      %1652 = vmatpush1.bf16.msra.mxu0 %v1634
      %1653 = vmatprep.subr.bf16.mxu0 0
      %1654 = vmatpush1.bf16.msra.mxu0 %v1635
      %1655 = vmatprep.subr.bf16.mxu0 0
      %1656 = vmatpush1.bf16.msra.mxu0 %v1636
      %1657 = vmatprep.subr.bf16.mxu0 0
      %1658 = vmatpush1.bf16.msra.mxu0 %v1637
      %1659 = vmatprep.subr.bf16.mxu0 0
      %1660 = vmatpush1.bf16.msra.mxu0 %v1638
      %1661 = vmatprep.subr.bf16.mxu0 0
      %1662 = vmatpush1.bf16.msra.mxu0 %v1639
      %1663 = vmatprep.subr.bf16.mxu0 0
      %1664 = vmatpush1.bf16.msra.mxu0 %v1640
      %1665 = vmatprep.subr.bf16.mxu0 0
      %1666 = vmatpush1.bf16.msra.mxu0 0
      %1667 = vmatprep.subr.bf16.mxu0 0
      %1668 = vmatpush1.bf16.msra.mxu0 0
      %1669 = vmatprep.subr.bf16.mxu0 0
      %1670 = vmatpush1.bf16.msra.mxu0 0
      %1671 = vmatprep.subr.bf16.mxu0 0
      %1672 = vmatpush1.bf16.msra.mxu0 0
      %1673 = vmatprep.subr.bf16.mxu0 0
      %1674 = vmatpush1.bf16.msra.mxu0 0
      %1675 = vmatprep.subr.bf16.mxu0 0
      %1676 = vmatpush1.bf16.msra.mxu0 0
      %1677 = vmatprep.subr.bf16.mxu0 0
      %1678 = vmatpush1.bf16.msra.mxu0 0
      %1679 = vmatprep.subr.bf16.mxu0 0
      %1680 = vmatpush1.bf16.msra.mxu0 0
      %1681 = vmatprep.mubr.bf16.mxu0 0
      %1682 = vmatmul.mubr.bf16.gmra.mrb[0].mxu0 %v1599
      %v1683 = vpop.f32.mrb[0].mxu0
      %v1684 = vadd.f32 0.0, %v1683
      %v1685 = vpop.f32.mrb[0].mxu0
      %v1686 = vpop.f32.mrb[0].mxu0
      %v1687 = vadd.f32 0.0, %v1686
      %v1688 = vpop.f32.mrb[0].mxu0
      %1689 = vdwg.mxu0
      %v1690 = vadd.f32 %v1590, %v1684
      %v1691 = vadd.f32 %v1591, %v1687
      %vm1692 = vcmask 1044480
      %v1693 = vrot.slane %v1096, 3
      %v1694 = vrot.slane %v1097, 3
      %v1695 = vsel %vm1692, %v1693, %v1694
      %v1713 = vunpack.c.l.b16 %v1074
      %v1714 = vunpack.c.l.b16 %v1075
      %v1715 = vunpack.c.l.b16 %v1076
      %v1716 = vunpack.c.l.b16 %v1077
      %v1717 = vunpack.c.l.b16 %v1078
      %v1718 = vunpack.c.l.b16 %v1079
      %v1719 = vunpack.c.l.b16 %v1080
      %v1720 = vunpack.c.l.b16 %v1081
      %v1721 = vunpack.c.l.b16 %v1082
      %v1722 = vunpack.c.l.b16 %v1083
      %v1723 = vunpack.c.l.b16 %v1084
      %v1724 = vunpack.c.l.b16 %v1085
      %v1725 = vunpack.c.l.b16 %v1086
      %v1726 = vunpack.c.l.b16 %v1087
      %v1727 = vunpack.c.l.b16 %v1088
      %v1728 = vunpack.c.l.b16 %v1089
      %v1729 = vpack.c.b16 %v1714, %v1713
      %v1730 = vpack.c.b16 %v1716, %v1715
      %v1731 = vpack.c.b16 %v1718, %v1717
      %v1732 = vpack.c.b16 %v1720, %v1719
      %v1733 = vpack.c.b16 %v1722, %v1721
      %v1734 = vpack.c.b16 %v1724, %v1723
      %v1735 = vpack.c.b16 %v1726, %v1725
      %v1736 = vpack.c.b16 %v1728, %v1727
      %1745 = vmatprep.subr.bf16.mxu0 0
      %1746 = vmatpush1.bf16.msra.mxu0 %v1729
      %1747 = vmatprep.subr.bf16.mxu0 0
      %1748 = vmatpush1.bf16.msra.mxu0 %v1730
      %1749 = vmatprep.subr.bf16.mxu0 0
      %1750 = vmatpush1.bf16.msra.mxu0 %v1731
      %1751 = vmatprep.subr.bf16.mxu0 0
      %1752 = vmatpush1.bf16.msra.mxu0 %v1732
      %1753 = vmatprep.subr.bf16.mxu0 0
      %1754 = vmatpush1.bf16.msra.mxu0 %v1733
      %1755 = vmatprep.subr.bf16.mxu0 0
      %1756 = vmatpush1.bf16.msra.mxu0 %v1734
      %1757 = vmatprep.subr.bf16.mxu0 0
      %1758 = vmatpush1.bf16.msra.mxu0 %v1735
      %1759 = vmatprep.subr.bf16.mxu0 0
      %1760 = vmatpush1.bf16.msra.mxu0 %v1736
      %1761 = vmatprep.subr.bf16.mxu0 0
      %1762 = vmatpush1.bf16.msra.mxu0 0
      %1763 = vmatprep.subr.bf16.mxu0 0
      %1764 = vmatpush1.bf16.msra.mxu0 0
      %1765 = vmatprep.subr.bf16.mxu0 0
      %1766 = vmatpush1.bf16.msra.mxu0 0
      %1767 = vmatprep.subr.bf16.mxu0 0
      %1768 = vmatpush1.bf16.msra.mxu0 0
      %1769 = vmatprep.subr.bf16.mxu0 0
      %1770 = vmatpush1.bf16.msra.mxu0 0
      %1771 = vmatprep.subr.bf16.mxu0 0
      %1772 = vmatpush1.bf16.msra.mxu0 0
      %1773 = vmatprep.subr.bf16.mxu0 0
      %1774 = vmatpush1.bf16.msra.mxu0 0
      %1775 = vmatprep.subr.bf16.mxu0 0
      %1776 = vmatpush1.bf16.msra.mxu0 0
      %1777 = vmatprep.mubr.bf16.mxu0 0
      %1778 = vmatmul.mubr.bf16.gmra.mrb[0].mxu0 %v1695
      %v1779 = vpop.f32.mrb[0].mxu0
      %v1780 = vadd.f32 0.0, %v1779
      %v1781 = vpop.f32.mrb[0].mxu0
      %v1782 = vpop.f32.mrb[0].mxu0
      %v1783 = vadd.f32 0.0, %v1782
      %v1784 = vpop.f32.mrb[0].mxu0
      %1785 = vdwg.mxu0
      %v1786 = vadd.f32 %v1690, %v1780
      %v1787 = vadd.f32 %v1691, %v1783
      %v1788 = vmax.f32 %v1786, 0.0
      %v1789 = vmax.f32 %v1787, 0.0
      %v1790 = vld [vmem:[%s3] sm:$0xf]
      %v1791 = vld [vmem:[%s3 + $0x4] sm:$0xf]
      %v1792 = vld [vmem:[%s3 + $0x8] sm:$0xf]
      %v1793 = vld [vmem:[%s3 + $0xc] sm:$0xf]
      %v1794 = vld [vmem:[%s3 + $0x10] sm:$0xf]
      %v1795 = vld [vmem:[%s3 + $0x14] sm:$0xf]
      %v1796 = vld [vmem:[%s3 + $0x18] sm:$0xf]
      %v1797 = vld [vmem:[%s3 + $0x1c] sm:$0xf]
      %s1798 = scalar_lea.vmem %s3, 32
      %v1799 = vld [vmem:[%s1798] sm:$0xf]
      %v1800 = vld [vmem:[%s1798 + $0x4] sm:$0xf]
      %v1801 = vld [vmem:[%s1798 + $0x8] sm:$0xf]
      %v1802 = vld [vmem:[%s1798 + $0xc] sm:$0xf]
      %v1803 = vld [vmem:[%s1798 + $0x10] sm:$0xf]
      %v1804 = vld [vmem:[%s1798 + $0x14] sm:$0xf]
      %v1805 = vld [vmem:[%s1798 + $0x18] sm:$0xf]
      %v1806 = vld [vmem:[%s1798 + $0x1c] sm:$0xf]
      %s1807 = scalar_lea.vmem %s3, 64
      %v1808 = vld [vmem:[%s1807] sm:$0xf]
      %v1809 = vld [vmem:[%s1807 + $0x4] sm:$0xf]
      %v1810 = vld [vmem:[%s1807 + $0x8] sm:$0xf]
      %v1811 = vld [vmem:[%s1807 + $0xc] sm:$0xf]
      %v1812 = vld [vmem:[%s1807 + $0x10] sm:$0xf]
      %v1813 = vld [vmem:[%s1807 + $0x14] sm:$0xf]
      %v1814 = vld [vmem:[%s1807 + $0x18] sm:$0xf]
      %v1815 = vld [vmem:[%s1807 + $0x1c] sm:$0xf]
      %v1816 = vld [vmem:[%s5 + $0x1] sm:$0x1]
      %vm1817 = vcmask 523264
      %1818 = vst.msk [vmem:[#allocation2 + $0x3] sm:$0xff] %vm1817, %v1788
      %1819 = vst.msk [vmem:[#allocation2 + $0xb] sm:$0xff] %vm1817, %v1789
      %v1820 = vld [vmem:[#allocation2 + $0x2] sm:$0xff]
      %v1821 = vld [vmem:[#allocation2 + $0xa] sm:$0xff]
      %v1822 = vld [vmem:[#allocation2 + $0x12] sm:$0x3]
      %v1823 = vpack.c.bf16 %v1821, %v1820
      %v1824 = vpack.c.bf16 %v1822, %v1822
      %v1825 = vlaneseq
      %v1826 = vshrl.u32 %v1825, 7
      %v1827 = vsub.s32 0, %v1826
      %v1828 = vrot.slane %v1816, %v1827
      %v1837 = vunpack.c.l.b16 %v1790
      %v1838 = vunpack.c.l.b16 %v1791
      %v1839 = vunpack.c.l.b16 %v1792
      %v1840 = vunpack.c.l.b16 %v1793
      %v1841 = vunpack.c.l.b16 %v1794
      %v1842 = vunpack.c.l.b16 %v1795
      %v1843 = vunpack.c.l.b16 %v1796
      %v1844 = vunpack.c.l.b16 %v1797
      %v1845 = vpack.c.b16 %v1838, %v1837
      %v1846 = vpack.c.b16 %v1840, %v1839
      %v1847 = vpack.c.b16 %v1842, %v1841
      %v1848 = vpack.c.b16 %v1844, %v1843
      %v1854 = vsel %vm1817, %v1823, 0
      %1856 = vmatprep.subr.bf16.mxu0 0
      %1857 = vmatpush1.bf16.msra.mxu0 %v1845
      %1858 = vmatprep.subr.bf16.mxu0 0
      %1859 = vmatpush1.bf16.msra.mxu0 %v1846
      %1860 = vmatprep.subr.bf16.mxu0 0
      %1861 = vmatpush1.bf16.msra.mxu0 %v1847
      %1862 = vmatprep.subr.bf16.mxu0 0
      %1863 = vmatpush1.bf16.msra.mxu0 %v1848
      %1864 = vmatprep.subr.bf16.mxu0 0
      %1865 = vmatpush1.bf16.msra.mxu0 0
      %1866 = vmatprep.subr.bf16.mxu0 0
      %1867 = vmatpush1.bf16.msra.mxu0 0
      %1868 = vmatprep.subr.bf16.mxu0 0
      %1869 = vmatpush1.bf16.msra.mxu0 0
      %1870 = vmatprep.subr.bf16.mxu0 0
      %1871 = vmatpush1.bf16.msra.mxu0 0
      %1872 = vmatprep.subr.bf16.mxu0 0
      %1873 = vmatpush1.bf16.msra.mxu0 0
      %1874 = vmatprep.subr.bf16.mxu0 0
      %1875 = vmatpush1.bf16.msra.mxu0 0
      %1876 = vmatprep.subr.bf16.mxu0 0
      %1877 = vmatpush1.bf16.msra.mxu0 0
      %1878 = vmatprep.subr.bf16.mxu0 0
      %1879 = vmatpush1.bf16.msra.mxu0 0
      %1880 = vmatprep.subr.bf16.mxu0 0
      %1881 = vmatpush1.bf16.msra.mxu0 0
      %1882 = vmatprep.subr.bf16.mxu0 0
      %1883 = vmatpush1.bf16.msra.mxu0 0
      %1884 = vmatprep.subr.bf16.mxu0 0
      %1885 = vmatpush1.bf16.msra.mxu0 0
      %1886 = vmatprep.subr.bf16.mxu0 0
      %1887 = vmatpush1.bf16.msra.mxu0 0
      %1888 = vmatprep.mubr.bf16.mxu0 0
      %1889 = vmatmul.mubr.bf16.gmra.mrb[0].mxu0 %v1854
      %v1890 = vpop.f32.mrb[0].mxu0
      %v1891 = vadd.f32 0.0, %v1890
      %v1892 = vpop.f32.mrb[0].mxu0
      %v1893 = vpop.f32.mrb[0].mxu0
      %v1894 = vadd.f32 0.0, %v1893
      %v1895 = vpop.f32.mrb[0].mxu0
      %1896 = vdwg.mxu0
      %v1897 = vadd.f32 %v1828, %v1891
      %v1898 = vadd.f32 %v1828, %v1894
      %v1899 = vshrl.u32 %v1823, 16
      %v1901 = vshll.u32 %v1823, 16
      %v1903 = vrot.slane %v1901, 1
      %v1904 = vor.u32 %v1899, %v1903
      %v1906 = vshll.u32 %v1824, 16
      %v1908 = vrot.slane %v1906, 1
      %v1909 = vsel %vm410, %v1904, %v1908
      %v1918 = vunpack.c.l.b16 %v1799
      %v1919 = vunpack.c.l.b16 %v1800
      %v1920 = vunpack.c.l.b16 %v1801
      %v1921 = vunpack.c.l.b16 %v1802
      %v1922 = vunpack.c.l.b16 %v1803
      %v1923 = vunpack.c.l.b16 %v1804
      %v1924 = vunpack.c.l.b16 %v1805
      %v1925 = vunpack.c.l.b16 %v1806
      %v1926 = vpack.c.b16 %v1919, %v1918
      %v1927 = vpack.c.b16 %v1921, %v1920
      %v1928 = vpack.c.b16 %v1923, %v1922
      %v1929 = vpack.c.b16 %v1925, %v1924
      %v1935 = vsel %vm1817, %v1909, 0
      %1937 = vmatprep.subr.bf16.mxu0 0
      %1938 = vmatpush1.bf16.msra.mxu0 %v1926
      %1939 = vmatprep.subr.bf16.mxu0 0
      %1940 = vmatpush1.bf16.msra.mxu0 %v1927
      %1941 = vmatprep.subr.bf16.mxu0 0
      %1942 = vmatpush1.bf16.msra.mxu0 %v1928
      %1943 = vmatprep.subr.bf16.mxu0 0
      %1944 = vmatpush1.bf16.msra.mxu0 %v1929
      %1945 = vmatprep.subr.bf16.mxu0 0
      %1946 = vmatpush1.bf16.msra.mxu0 0
      %1947 = vmatprep.subr.bf16.mxu0 0
      %1948 = vmatpush1.bf16.msra.mxu0 0
      %1949 = vmatprep.subr.bf16.mxu0 0
      %1950 = vmatpush1.bf16.msra.mxu0 0
      %1951 = vmatprep.subr.bf16.mxu0 0
      %1952 = vmatpush1.bf16.msra.mxu0 0
      %1953 = vmatprep.subr.bf16.mxu0 0
      %1954 = vmatpush1.bf16.msra.mxu0 0
      %1955 = vmatprep.subr.bf16.mxu0 0
      %1956 = vmatpush1.bf16.msra.mxu0 0
      %1957 = vmatprep.subr.bf16.mxu0 0
      %1958 = vmatpush1.bf16.msra.mxu0 0
      %1959 = vmatprep.subr.bf16.mxu0 0
      %1960 = vmatpush1.bf16.msra.mxu0 0
      %1961 = vmatprep.subr.bf16.mxu0 0
      %1962 = vmatpush1.bf16.msra.mxu0 0
      %1963 = vmatprep.subr.bf16.mxu0 0
      %1964 = vmatpush1.bf16.msra.mxu0 0
      %1965 = vmatprep.subr.bf16.mxu0 0
      %1966 = vmatpush1.bf16.msra.mxu0 0
      %1967 = vmatprep.subr.bf16.mxu0 0
      %1968 = vmatpush1.bf16.msra.mxu0 0
      %1969 = vmatprep.mubr.bf16.mxu0 0
      %1970 = vmatmul.mubr.bf16.gmra.mrb[0].mxu0 %v1935
      %v1971 = vpop.f32.mrb[0].mxu0
      %v1972 = vadd.f32 0.0, %v1971
      %v1973 = vpop.f32.mrb[0].mxu0
      %v1974 = vpop.f32.mrb[0].mxu0
      %v1975 = vadd.f32 0.0, %v1974
      %v1976 = vpop.f32.mrb[0].mxu0
      %1977 = vdwg.mxu0
      %v1978 = vadd.f32 %v1897, %v1972
      %v1979 = vadd.f32 %v1898, %v1975
      %v1982 = vrot.slane %v1823, 1
      %v1983 = vrot.slane %v1824, 1
      %v1984 = vsel %vm517, %v1982, %v1983
      %v1993 = vunpack.c.l.b16 %v1808
      %v1994 = vunpack.c.l.b16 %v1809
      %v1995 = vunpack.c.l.b16 %v1810
      %v1996 = vunpack.c.l.b16 %v1811
      %v1997 = vunpack.c.l.b16 %v1812
      %v1998 = vunpack.c.l.b16 %v1813
      %v1999 = vunpack.c.l.b16 %v1814
      %v2000 = vunpack.c.l.b16 %v1815
      %v2001 = vpack.c.b16 %v1994, %v1993
      %v2002 = vpack.c.b16 %v1996, %v1995
      %v2003 = vpack.c.b16 %v1998, %v1997
      %v2004 = vpack.c.b16 %v2000, %v1999
      %v2010 = vsel %vm1817, %v1984, 0
      %2012 = vmatprep.subr.bf16.mxu0 0
      %2013 = vmatpush1.bf16.msra.mxu0 %v2001
      %2014 = vmatprep.subr.bf16.mxu0 0
      %2015 = vmatpush1.bf16.msra.mxu0 %v2002
      %2016 = vmatprep.subr.bf16.mxu0 0
      %2017 = vmatpush1.bf16.msra.mxu0 %v2003
      %2018 = vmatprep.subr.bf16.mxu0 0
      %2019 = vmatpush1.bf16.msra.mxu0 %v2004
      %2020 = vmatprep.subr.bf16.mxu0 0
      %2021 = vmatpush1.bf16.msra.mxu0 0
      %2022 = vmatprep.subr.bf16.mxu0 0
      %2023 = vmatpush1.bf16.msra.mxu0 0
      %2024 = vmatprep.subr.bf16.mxu0 0
      %2025 = vmatpush1.bf16.msra.mxu0 0
      %2026 = vmatprep.subr.bf16.mxu0 0
      %2027 = vmatpush1.bf16.msra.mxu0 0
      %2028 = vmatprep.subr.bf16.mxu0 0
      %2029 = vmatpush1.bf16.msra.mxu0 0
      %2030 = vmatprep.subr.bf16.mxu0 0
      %2031 = vmatpush1.bf16.msra.mxu0 0
      %2032 = vmatprep.subr.bf16.mxu0 0
      %2033 = vmatpush1.bf16.msra.mxu0 0
      %2034 = vmatprep.subr.bf16.mxu0 0
      %2035 = vmatpush1.bf16.msra.mxu0 0
      %2036 = vmatprep.subr.bf16.mxu0 0
      %2037 = vmatpush1.bf16.msra.mxu0 0
      %2038 = vmatprep.subr.bf16.mxu0 0
      %2039 = vmatpush1.bf16.msra.mxu0 0
      %2040 = vmatprep.subr.bf16.mxu0 0
      %2041 = vmatpush1.bf16.msra.mxu0 0
      %2042 = vmatprep.subr.bf16.mxu0 0
      %2043 = vmatpush1.bf16.msra.mxu0 0
      %2044 = vmatprep.mubr.bf16.mxu0 0
      %2045 = vmatmul.mubr.bf16.gmra.mrb[0].mxu0 %v2010
      %v2046 = vpop.f32.mrb[0].mxu0
      %v2047 = vadd.f32 0.0, %v2046
      %v2048 = vpop.f32.mrb[0].mxu0
      %v2049 = vpop.f32.mrb[0].mxu0
      %v2050 = vadd.f32 0.0, %v2049
      %v2051 = vpop.f32.mrb[0].mxu0
      %2052 = vdwg.mxu0
      %v2053 = vadd.f32 %v1978, %v2047
      %v2054 = vadd.f32 %v1979, %v2050
      %v2055 = vxor.u32 %v2053, 2147483648
      %v2056 = vxor.u32 %v2054, 2147483648
      %v2057 = vmul.f32 %v2055, 1.442695
      %v2058 = vpow.pop %v2057
      %v2059 = vmul.f32 %v2056, 1.442695
      %v2060 = vpow.pop %v2059
      %v2061 = vadd.f32 %v2058, 1.0
      %v2062 = vadd.f32 %v2060, 1.0
      %v2063 = vrcp.pop %v2061
      %v2064 = vmul.f32 1.0, %v2063
      %v2065 = vrcp.pop %v2062
      %v2066 = vmul.f32 1.0, %v2065
      %2069 = vrot.lane.b32.xlu0 %v970, 64
      %v2070 = vpop.permute.xlu0 %2069
      %2071 = vrot.lane.b32.xlu0 %v971, 64
      %v2072 = vpop.permute.xlu0 %2071
      %v2075 = vsub.f32 %v970, %v2070
      %v2076 = vsub.f32 %v971, %v2072
      %2079 = vrot.lane.b32.xlu0 %v2075, 64
      %v2080 = vpop.permute.xlu0 %2079
      %2081 = vrot.lane.b32.xlu0 %v2076, 64
      %v2082 = vpop.permute.xlu0 %2081
      %v2085 = vmul.f32 %v2064, %v2080
      %v2086 = vmul.f32 %v2066, %v2082
      %v2087 = vadd.f32 %v970, %v2085
      %v2088 = vadd.f32 %v971, %v2086
      %2089 = vst.msk [vmem:[%s251] sm:$0xff] %vm1817, %v2087
      %2090 = vst.msk [vmem:[%s251 + $0x8] sm:$0xff] %vm1817, %v2088
      %p2091 = scmp.lt.s32.totalorder %s17, 1
      %s2092 = scalar_select %p2091, %s17, 1
      %s2093 = smul.addr %s2092, 2
      %s2094 = smul.addr %s2093, 8
      %s2095 = scalar_lea.vmem %s6, %s2094
      // Predicated region
      $region45: #{mask_attention_forward.1} parent=43 // pred_check
        %p2096 = pneg %p166
      $region46: #{mask_attention_forward.1} parent=43 // pred_check_branch
        %2098 = sbr.rel (%p2096) target = $region48
      $region47: #{mask_attention_forward.1} parent=43 // pred_region
        _
      $region48: #{mask_attention_forward.1} parent=43 // pred_fallthru
        _
    $region44: #{mask_attention_forward.1} parent=5 // pred_fallthru
      _
    %p2099 = scmp.le.s32.totalorder 2, %s12
    // Predicated region
    $region49: #{mask_attention_forward.1} parent=5 // pred_check
      %p2100 = pneg %p2099
    $region50: #{mask_attention_forward.1} parent=5 // pred_check_branch
      %2102 = sbr.rel (%p2100) target = $region52
    $region51: #{mask_attention_forward.1} parent=5 // pred_region
      %s2103 = ssub.s32 %s12, 2
      // Predicated region
      $region53: #{mask_attention_forward.1} parent=51 // pred_check
        %p2104 = pneg %p172
      $region54: #{mask_attention_forward.1} parent=51 // pred_check_branch
        %2106 = sbr.rel (%p2104) target = $region56
      $region55: #{mask_attention_forward.1} parent=51 // pred_region
        %p2107 = scmp.lt.s32.totalorder %s18, 1
        %s2108 = scalar_select %p2107, %s18, 1
        %s2109 = smul.addr %s2108, 2
        %s2110 = smul.addr %s2109, 8
        %s2111 = scalar_lea.vmem %s6, %s2110
      $region56: #{mask_attention_forward.1} parent=51 // pred_fallthru
        _
    $region52: #{mask_attention_forward.1} parent=5 // pred_fallthru
      _
  $region6: #{mask_attention_forward.1} parent=0 // loop_footer
    %s16 = sadd.s32 1, %s12
  $region7: #{mask_attention_forward.1} parent=0 // loop_footer_branch
    %11 = sbr.rel target = $region3
  $region8: #{mask_attention_forward.1} parent=0 // loop_exit
    _

</llo_original>
